<compile_context>
chip_gen: v6e
topology: v6e:2x2x1
jax: 0.10.0
libtpu: 0.0.40
codegen_flags: <defaults>
</compile_context>

<pallas_src>
import functools

import jax
import jax.numpy as jnp
from jax.experimental import pallas as pl
from jax.experimental.pallas import tpu as pltpu

# ----------------------------------------------------------------------------
# Problem sizes / hyper-parameters
# ----------------------------------------------------------------------------
B = 8          # number of graphs in the batch
DPHEN = 19     # phenotype dims (matches torch.ones(19) weights in __init__)
E = 32         # graph embedding dim
NBINS = 64     # soft-histogram bins for the distribution loss
PACK = 2 * NBINS                       # pred + target histograms packed on lanes
BIN_LO, BIN_HI = -3.0, 3.0
BIN_STEP = (BIN_HI - BIN_LO) / (NBINS - 1)   # jnp.linspace spacing (endpoints incl.)
BANDWIDTH = 2.0 * (BIN_HI - BIN_LO) / NBINS
BIN_W = (BIN_HI - BIN_LO) / NBINS
TAU = 0.1                      # SupCR temperature
LAMBDA_DIST = 1.0
LAMBDA_SUPCR = 1.0


# ----------------------------------------------------------------------------
# Fused kernel: WeightedMSE + WeightedDistLoss + SupCR(mean)
# ----------------------------------------------------------------------------
def _cell_loss_kernel(pred_ref, tgt_ref, z_ref, wmse_ref, wdist_ref,
                      mse_ref, div_ref, con_ref, *, use_bf16_exp: bool):
    p = pred_ref[...].astype(jnp.float32)        # (B, D)
    t = tgt_ref[...].astype(jnp.float32)         # (B, D)
    z = z_ref[...].astype(jnp.float32)           # (B, E)
    w_mse = wmse_ref[...].astype(jnp.float32)    # (1, D)  lane-major
    w_dist = wdist_ref[...].astype(jnp.float32)  # (1, D)  lane-major
    n = p.shape[0]

    # ---------------- Weighted per-dimension MSE ----------------
    diff = p - t
    per_dim = jnp.sum(diff * diff, axis=0, keepdims=True) * jnp.float32(1.0 / n)  # (1, D)
    mse_num = jnp.sum(per_dim * w_mse, axis=1, keepdims=True)                     # (1, 1)
    mse_den = jnp.sum(w_mse, axis=1, keepdims=True)
    mse_ref[...] = mse_num / mse_den

    # ---------------- Weighted distribution loss (KDE + 1-D Wasserstein) ----
    # Lane packing: lanes [0, NBINS) hold the prediction histogram bins,
    # lanes [NBINS, 2*NBINS) hold the target histogram bins.
    lane = jax.lax.broadcasted_iota(jnp.int32, (1, PACK), 1)              # (1, 128)
    bin_idx = lane & (NBINS - 1)                                          # lane mod 64
    centers = jnp.float32(BIN_LO) + bin_idx.astype(jnp.float32) * jnp.float32(BIN_STEP)
    is_tgt = lane >= NBINS                                                # (1, 128) bool

    x_pack = jnp.where(is_tgt, t[:, :, None], p[:, :, None])              # (B, D, 128)
    d = (x_pack - centers) * jnp.float32(1.0 / BANDWIDTH)
    e = jnp.float32(-0.5) * d * d
    if use_bf16_exp:
        # bf16 EUP path (v6e / v7x); accumulate histogram in f32.
        k = jnp.exp(e.astype(jnp.bfloat16)).astype(jnp.float32)
    else:
        k = jnp.exp(e)
    hist = jnp.sum(k, axis=0)                                             # (D, 128) f32

    # Normalize each 64-lane half by its own mass (epsilon after f32 accumulation).
    mask_t = is_tgt.astype(jnp.float32)                                   # (1, 128)
    sum_t = jnp.sum(hist * mask_t, axis=1, keepdims=True)                 # (D, 1)
    sum_p = jnp.sum(hist * (1.0 - mask_t), axis=1, keepdims=True)         # (D, 1)
    h_norm = hist / (jnp.where(is_tgt, sum_t, sum_p) + jnp.float32(1e-12))

    # Block-upper-triangular ones matrix (built in-kernel) -> per-half CDF via one matmul.
    r = jax.lax.broadcasted_iota(jnp.int32, (PACK, PACK), 0)
    c = jax.lax.broadcasted_iota(jnp.int32, (PACK, PACK), 1)
    same_half = (r >= NBINS) == (c >= NBINS)
    tri = jnp.where((r <= c) & same_half, 1.0, 0.0).astype(jnp.float32)   # (128, 128)

    cdf = jnp.dot(h_norm, tri, preferred_element_type=jnp.float32)        # (D, 128)
    # Swap the two 64-lane halves (XLU rotate); |cdf - swap| holds |cdf_p - cdf_t|
    # twice, so scale the lane sum by 0.5.
    cdf_sw = pltpu.roll(cdf, shift=NBINS, axis=1)
    absdiff = jnp.abs(cdf - cdf_sw)                                       # (D, 128)
    w_abs = jnp.dot(w_dist, absdiff, preferred_element_type=jnp.float32)  # (1, 128)
    div_num = jnp.sum(w_abs, axis=1, keepdims=True) * jnp.float32(0.5 * BIN_W)
    div_den = jnp.sum(w_dist, axis=1, keepdims=True)
    div_ref[...] = div_num / div_den

    # ---------------- SupCR (mean over anchors computed in-kernel) ----------
    sq = jnp.sum(z * z, axis=1, keepdims=True)                            # (B, 1)
    gram = jnp.dot(z, z.T, preferred_element_type=jnp.float32)            # (B, B)
    d2 = jnp.maximum(sq + sq.T - 2.0 * gram, 0.0)
    sim = -jnp.sqrt(d2 + jnp.float32(1e-12))
    logits = sim * jnp.float32(1.0 / TAU)                                 # (B, B)

    yd = jnp.sum(jnp.abs(t[:, None, :] - t[None, :, :]), axis=-1)         # (B, B)

    row = jax.lax.broadcasted_iota(jnp.int32, (n, n), 0)
    col = jax.lax.broadcasted_iota(jnp.int32, (n, n), 1)
    off_diag = row != col

    neg_inf = jnp.float32(-1e30)
    logits_masked = jnp.where(off_diag, logits, neg_inf)
    row_max = jnp.max(logits_masked, axis=1, keepdims=True)               # (B, 1)
    shifted = logits - row_max
    exp_s = jnp.where(off_diag, jnp.exp(shifted), 0.0)                    # (B, B)

    # denom[i, j] = sum_{k != i, yd[i,k] >= yd[i,j]} exp(logits[i,k] - max_i)
    cond = (yd[:, None, :] >= yd[:, :, None]).astype(jnp.float32)         # (i, j, k)
    denom = jnp.sum(cond * exp_s[:, None, :], axis=-1)                    # (B, B)

    per_pair = jnp.where(off_diag, jnp.log(denom + jnp.float32(1e-12)) - shifted, 0.0)
    per_anchor = jnp.sum(per_pair, axis=1, keepdims=True) * jnp.float32(1.0 / (n - 1))
    con_ref[...] = jnp.sum(per_anchor, axis=0, keepdims=True) * jnp.float32(1.0 / n)


# ----------------------------------------------------------------------------
# Wrapper
# ----------------------------------------------------------------------------
def _vmem_spec():
    return pl.BlockSpec(memory_space=pltpu.MemorySpace.VMEM)


def _supports_bf16_eup() -> bool:
    """Use the bf16 exp path only on chips with a bf16 EUP (v6e / v7x)."""
    try:
        kind = jax.devices()[0].device_kind.lower()
    except Exception:
        return False
    return ("v6" in kind) or ("v7" in kind) or ("7x" in kind)


def make_cell_loss(use_bf16_exp: bool):
    kernel = functools.partial(_cell_loss_kernel, use_bf16_exp=use_bf16_exp)
    fused = pl.pallas_call(
        kernel,
        out_shape=(jax.ShapeDtypeStruct((1, 1), jnp.float32),
                   jax.ShapeDtypeStruct((1, 1), jnp.float32),
                   jax.ShapeDtypeStruct((1, 1), jnp.float32)),
        in_specs=[_vmem_spec() for _ in range(5)],
        out_specs=(_vmem_spec(), _vmem_spec(), _vmem_spec()),
    )

    @jax.jit
    def cell_loss(predictions, targets, graph_embeddings, mse_weights, dist_weights):
        """JAX/Pallas equivalent of CellLoss.forward (single fused kernel)."""
        w_mse = mse_weights.reshape(1, DPHEN).astype(jnp.float32)
        w_dist = dist_weights.reshape(1, DPHEN).astype(jnp.float32)

        mse11, div11, con11 = fused(
            predictions.astype(jnp.float32),
            targets.astype(jnp.float32),
            graph_embeddings.astype(jnp.float32),
            w_mse, w_dist)

        mse_loss = mse11[0, 0]
        div_loss = div11[0, 0]
        con_loss = con11[0, 0]

        weighted_mse = mse_loss
        weighted_div = LAMBDA_DIST * div_loss
        weighted_con = LAMBDA_SUPCR * con_loss
        total_weighted = weighted_mse + weighted_div + weighted_con
        total_unweighted = mse_loss + div_loss + con_loss

        return {
            "total_loss": total_weighted,
            "norm_mse": weighted_mse / total_weighted,
            "norm_div": weighted_div / total_weighted,
            "norm_con": weighted_con / total_weighted,
            "raw_mse": weighted_mse,
            "raw_div": weighted_div,
            "raw_con": weighted_con,
            "unweighted_mse": mse_loss,
            "unweighted_div": div_loss,
            "unweighted_con": con_loss,
            "norm_unweighted_mse": mse_loss / total_unweighted,
            "norm_unweighted_div": div_loss / total_unweighted,
            "norm_unweighted_con": con_loss / total_unweighted,
        }

    return cell_loss


# ----------------------------------------------------------------------------
# Main
# ----------------------------------------------------------------------------
if __name__ == "__main__":
    key = jax.random.PRNGKey(0)
    k_pred, k_tgt, k_emb = jax.random.split(key, 3)

    predictions = jax.random.normal(k_pred, (B, DPHEN), dtype=jnp.float32)
    targets = jax.random.normal(k_tgt, (B, DPHEN), dtype=jnp.float32)
    graph_embeddings = jax.random.normal(k_emb, (B, E), dtype=jnp.float32)

    # Deterministic parameter init: weights = ones(19), mirroring __init__.
    mse_weights = jnp.ones((DPHEN,), dtype=jnp.float32)
    dist_weights = jnp.ones((DPHEN,), dtype=jnp.float32)

    use_bf16 = _supports_bf16_eup()
    loss_fn = make_cell_loss(use_bf16)
    try:
        out = loss_fn(predictions, targets, graph_embeddings, mse_weights, dist_weights)
        out = jax.tree_util.tree_map(jax.block_until_ready, out)
    except Exception:
        if not use_bf16:
            raise
        # Defensive fallback: if the bf16 exp path fails to lower on this chip,
        # rebuild with the universally supported f32 EUP path.
        loss_fn = make_cell_loss(False)
        out = loss_fn(predictions, targets, graph_embeddings, mse_weights, dist_weights)
        out = jax.tree_util.tree_map(jax.block_until_ready, out)

    assert jnp.isfinite(out["total_loss"]), "non-finite total loss"
    print("KERNEL_OK")
</pallas_src>

<mosaic_0001>
module attributes {stable_mosaic.version = 11 : i64} {
  func.func @_cell_loss_kernel(%arg0: memref<8x19xf32, #tpu.memory_space<vmem>>, %arg1: memref<8x19xf32, #tpu.memory_space<vmem>>, %arg2: memref<8x32xf32, #tpu.memory_space<vmem>>, %arg3: memref<1x19xf32, #tpu.memory_space<vmem>>, %arg4: memref<1x19xf32, #tpu.memory_space<vmem>>, %arg5: memref<1x1xf32, #tpu.memory_space<vmem>>, %arg6: memref<1x1xf32, #tpu.memory_space<vmem>>, %arg7: memref<1x1xf32, #tpu.memory_space<vmem>>) attributes {dimension_semantics = [], scalar_prefetch = 0 : i64, scratch_operands = 0 : i64, tpu.core_type = #tpu.core_type<tc>} {
    %c0 = arith.constant 0 : index
    %c0_0 = arith.constant 0 : index
    %0 = vector.load %arg0[%c0, %c0_0] : memref<8x19xf32, #tpu.memory_space<vmem>>, vector<8x19xf32>
    %c0_1 = arith.constant 0 : index
    %c0_2 = arith.constant 0 : index
    %1 = vector.load %arg1[%c0_1, %c0_2] : memref<8x19xf32, #tpu.memory_space<vmem>>, vector<8x19xf32>
    %c0_3 = arith.constant 0 : index
    %c0_4 = arith.constant 0 : index
    %2 = vector.load %arg2[%c0_3, %c0_4] : memref<8x32xf32, #tpu.memory_space<vmem>>, vector<8x32xf32>
    %c0_5 = arith.constant 0 : index
    %c0_6 = arith.constant 0 : index
    %3 = vector.load %arg3[%c0_5, %c0_6] : memref<1x19xf32, #tpu.memory_space<vmem>>, vector<1x19xf32>
    %c0_7 = arith.constant 0 : index
    %c0_8 = arith.constant 0 : index
    %4 = vector.load %arg4[%c0_7, %c0_8] : memref<1x19xf32, #tpu.memory_space<vmem>>, vector<1x19xf32>
    %5 = arith.subf %0, %1 : vector<8x19xf32>
    %6 = arith.mulf %5, %5 : vector<8x19xf32>
    %cst = arith.constant dense<0.000000e+00> : vector<19xf32>
    %7 = vector.multi_reduction <add>, %6, %cst [0] : vector<8x19xf32> to vector<19xf32>
    %8 = vector.shape_cast %7 : vector<19xf32> to vector<1x19xf32>
    %cst_9 = arith.constant 1.250000e-01 : f32
    %9 = vector.broadcast %cst_9 : f32 to vector<1x19xf32>
    %10 = arith.mulf %8, %9 : vector<1x19xf32>
    %11 = arith.mulf %10, %3 : vector<1x19xf32>
    %cst_10 = arith.constant dense<0.000000e+00> : vector<1xf32>
    %12 = vector.multi_reduction <add>, %11, %cst_10 [1] : vector<1x19xf32> to vector<1xf32>
    %13 = vector.shape_cast %12 : vector<1xf32> to vector<1x1xf32>
    %cst_11 = arith.constant dense<0.000000e+00> : vector<1xf32>
    %14 = vector.multi_reduction <add>, %3, %cst_11 [1] : vector<1x19xf32> to vector<1xf32>
    %15 = vector.shape_cast %14 : vector<1xf32> to vector<1x1xf32>
    %16 = arith.divf %13, %15 : vector<1x1xf32>
    %c0_12 = arith.constant 0 : index
    %c0_13 = arith.constant 0 : index
    %17 = vector.load %arg5[%c0_12, %c0_13] : memref<1x1xf32, #tpu.memory_space<vmem>>, vector<1x1xf32>
    tpu.vector_store %arg5[%c0_12, %c0_13], %16 {strides = array<i32>} : memref<1x1xf32, #tpu.memory_space<vmem>>, vector<1x1xf32>,
    %18 = tpu.iota {dimensions = array<i32: 1>} : vector<1x128xi32>
    %c63_i32 = arith.constant 63 : i32
    %19 = vector.broadcast %c63_i32 : i32 to vector<1x128xi32>
    %20 = arith.andi %18, %19 : vector<1x128xi32>
    %21 = arith.sitofp %20 : vector<1x128xi32> to vector<1x128xf32>
    %cst_14 = arith.constant 0.095238097 : f32
    %22 = vector.broadcast %cst_14 : f32 to vector<1x128xf32>
    %23 = arith.mulf %21, %22 : vector<1x128xf32>
    %cst_15 = arith.constant -3.000000e+00 : f32
    %24 = vector.broadcast %cst_15 : f32 to vector<1x128xf32>
    %25 = arith.addf %24, %23 : vector<1x128xf32>
    %c64_i32 = arith.constant 64 : i32
    %26 = vector.broadcast %c64_i32 : i32 to vector<1x128xi32>
    %27 = arith.cmpi sge, %18, %26 : vector<1x128xi32>
    %28 = vector.shape_cast %1 : vector<8x19xf32> to vector<8x19x1xf32>
    %29 = vector.shape_cast %0 : vector<8x19xf32> to vector<8x19x1xf32>
    %30 = vector.shape_cast %27 : vector<1x128xi1> to vector<1x1x128xi1>
    %31 = vector.broadcast %30 : vector<1x1x128xi1> to vector<8x19x128xi1>
    %32 = vector.shape_cast %28 : vector<8x19x1xf32> to vector<8x19x1xf32>
    %33 = vector.broadcast %32 : vector<8x19x1xf32> to vector<8x19x128xf32>
    %34 = vector.shape_cast %29 : vector<8x19x1xf32> to vector<8x19x1xf32>
    %35 = vector.broadcast %34 : vector<8x19x1xf32> to vector<8x19x128xf32>
    %36 = arith.select %31, %33, %35 : vector<8x19x128xi1>, vector<8x19x128xf32>
    %37 = vector.shape_cast %25 : vector<1x128xf32> to vector<1x1x128xf32>
    %38 = vector.broadcast %37 : vector<1x1x128xf32> to vector<8x19x128xf32>
    %39 = arith.subf %36, %38 : vector<8x19x128xf32>
    %cst_16 = arith.constant 5.33333349 : f32
    %40 = vector.broadcast %cst_16 : f32 to vector<8x19x128xf32>
    %41 = arith.mulf %39, %40 : vector<8x19x128xf32>
    %cst_17 = arith.constant -5.000000e-01 : f32
    %42 = vector.broadcast %cst_17 : f32 to vector<8x19x128xf32>
    %43 = arith.mulf %42, %41 : vector<8x19x128xf32>
    %44 = arith.mulf %43, %41 : vector<8x19x128xf32>
    %45 = math.exp %44 : vector<8x19x128xf32>
    %cst_18 = arith.constant dense<0.000000e+00> : vector<19x128xf32>
    %46 = vector.multi_reduction <add>, %45, %cst_18 [0] : vector<8x19x128xf32> to vector<19x128xf32>
    %47 = arith.extui %27 : vector<1x128xi1> to vector<1x128xi32>
    %48 = arith.sitofp %47 : vector<1x128xi32> to vector<1x128xf32>
    %49 = vector.broadcast %48 : vector<1x128xf32> to vector<19x128xf32>
    %50 = arith.mulf %46, %49 : vector<19x128xf32>
    %cst_19 = arith.constant dense<0.000000e+00> : vector<19xf32>
    %51 = vector.multi_reduction <add>, %50, %cst_19 [1] : vector<19x128xf32> to vector<19xf32>
    %52 = vector.shape_cast %51 : vector<19xf32> to vector<19x1xf32>
    %cst_20 = arith.constant 1.000000e+00 : f32
    %53 = vector.broadcast %cst_20 : f32 to vector<1x128xf32>
    %54 = arith.subf %53, %48 : vector<1x128xf32>
    %55 = vector.broadcast %54 : vector<1x128xf32> to vector<19x128xf32>
    %56 = arith.mulf %46, %55 : vector<19x128xf32>
    %cst_21 = arith.constant dense<0.000000e+00> : vector<19xf32>
    %57 = vector.multi_reduction <add>, %56, %cst_21 [1] : vector<19x128xf32> to vector<19xf32>
    %58 = vector.shape_cast %57 : vector<19xf32> to vector<19x1xf32>
    %59 = vector.shape_cast %27 : vector<1x128xi1> to vector<1x128xi1>
    %60 = vector.broadcast %59 : vector<1x128xi1> to vector<19x128xi1>
    %61 = vector.shape_cast %52 : vector<19x1xf32> to vector<19x1xf32>
    %62 = vector.broadcast %61 : vector<19x1xf32> to vector<19x128xf32>
    %63 = vector.shape_cast %58 : vector<19x1xf32> to vector<19x1xf32>
    %64 = vector.broadcast %63 : vector<19x1xf32> to vector<19x128xf32>
    %65 = arith.select %60, %62, %64 : vector<19x128xi1>, vector<19x128xf32>
    %cst_22 = arith.constant 9.99999996E-13 : f32
    %66 = vector.broadcast %cst_22 : f32 to vector<19x128xf32>
    %67 = arith.addf %65, %66 : vector<19x128xf32>
    %68 = arith.divf %46, %67 : vector<19x128xf32>
    %69 = tpu.iota {dimensions = array<i32: 0>} : vector<128x128xi32>
    %70 = tpu.iota {dimensions = array<i32: 1>} : vector<128x128xi32>
    %c64_i32_23 = arith.constant 64 : i32
    %71 = vector.broadcast %c64_i32_23 : i32 to vector<128x128xi32>
    %72 = arith.cmpi sge, %69, %71 : vector<128x128xi32>
    %c64_i32_24 = arith.constant 64 : i32
    %73 = vector.broadcast %c64_i32_24 : i32 to vector<128x128xi32>
    %74 = arith.cmpi sge, %70, %73 : vector<128x128xi32>
    %75 = arith.xori %72, %74 : vector<128x128xi1>
    %cst_25 = arith.constant dense<true> : vector<128x128xi1>
    %76 = arith.xori %75, %cst_25 : vector<128x128xi1>
    %77 = arith.cmpi sle, %69, %70 : vector<128x128xi32>
    %78 = arith.andi %77, %76 : vector<128x128xi1>
    %cst_26 = arith.constant 1.000000e+00 : f32
    %cst_27 = arith.constant 0.000000e+00 : f32
    %79 = vector.broadcast %cst_26 : f32 to vector<128x128xf32>
    %80 = vector.broadcast %cst_27 : f32 to vector<128x128xf32>
    %81 = arith.select %78, %79, %80 : vector<128x128xi1>, vector<128x128xf32>
    %cst_28 = arith.constant dense<0.000000e+00> : vector<19x128xf32>
    %82 = tpu.matmul %68, %81, %cst_28 {dimension_numbers = #tpu.dot_dimension_numbers<[1], [0], [0], [1], [0, 0, 1, 1], [], []>} : vector<19x128xf32>, vector<128x128xf32>, vector<19x128xf32> -> vector<19x128xf32>
    %c64_i32_29 = arith.constant 64 : i32
    %83 = tpu.dynamic_rotate %82 by %c64_i32_29 dim 1 : vector<19x128xf32>, i32 -> vector<19x128xf32>
    %84 = arith.subf %82, %83 : vector<19x128xf32>
    %85 = math.absf %84 : vector<19x128xf32>
    %cst_30 = arith.constant dense<0.000000e+00> : vector<1x128xf32>
    %86 = tpu.matmul %4, %85, %cst_30 {dimension_numbers = #tpu.dot_dimension_numbers<[1], [0], [0], [1], [0, 0, 1, 1], [], []>} : vector<1x19xf32>, vector<19x128xf32>, vector<1x128xf32> -> vector<1x128xf32>
    %cst_31 = arith.constant dense<0.000000e+00> : vector<1xf32>
    %87 = vector.multi_reduction <add>, %86, %cst_31 [1] : vector<1x128xf32> to vector<1xf32>
    %88 = vector.shape_cast %87 : vector<1xf32> to vector<1x1xf32>
    %cst_32 = arith.constant 4.687500e-02 : f32
    %89 = vector.broadcast %cst_32 : f32 to vector<1x1xf32>
    %90 = arith.mulf %88, %89 : vector<1x1xf32>
    %cst_33 = arith.constant dense<0.000000e+00> : vector<1xf32>
    %91 = vector.multi_reduction <add>, %4, %cst_33 [1] : vector<1x19xf32> to vector<1xf32>
    %92 = vector.shape_cast %91 : vector<1xf32> to vector<1x1xf32>
    %93 = arith.divf %90, %92 : vector<1x1xf32>
    %c0_34 = arith.constant 0 : index
    %c0_35 = arith.constant 0 : index
    %94 = vector.load %arg6[%c0_34, %c0_35] : memref<1x1xf32, #tpu.memory_space<vmem>>, vector<1x1xf32>
    tpu.vector_store %arg6[%c0_34, %c0_35], %93 {strides = array<i32>} : memref<1x1xf32, #tpu.memory_space<vmem>>, vector<1x1xf32>,
    %95 = arith.mulf %2, %2 : vector<8x32xf32>
    %cst_36 = arith.constant dense<0.000000e+00> : vector<8xf32>
    %96 = vector.multi_reduction <add>, %95, %cst_36 [1] : vector<8x32xf32> to vector<8xf32>
    %97 = vector.shape_cast %96 : vector<8xf32> to vector<8x1xf32>
    %98 = tpu.transpose %2, [1, 0] : vector<8x32xf32> -> vector<32x8xf32>
    %cst_37 = arith.constant dense<0.000000e+00> : vector<8x8xf32>
    %99 = tpu.matmul %2, %98, %cst_37 {dimension_numbers = #tpu.dot_dimension_numbers<[1], [0], [0], [1], [0, 0, 1, 1], [], []>} : vector<8x32xf32>, vector<32x8xf32>, vector<8x8xf32> -> vector<8x8xf32>
    %100 = tpu.transpose %97, [1, 0] : vector<8x1xf32> -> vector<1x8xf32>
    %101 = vector.broadcast %97 : vector<8x1xf32> to vector<8x8xf32>
    %102 = vector.broadcast %100 : vector<1x8xf32> to vector<8x8xf32>
    %103 = arith.addf %101, %102 : vector<8x8xf32>
    %cst_38 = arith.constant 2.000000e+00 : f32
    %104 = vector.broadcast %cst_38 : f32 to vector<8x8xf32>
    %105 = arith.mulf %104, %99 : vector<8x8xf32>
    %106 = arith.subf %103, %105 : vector<8x8xf32>
    %cst_39 = arith.constant 0.000000e+00 : f32
    %107 = vector.broadcast %cst_39 : f32 to vector<8x8xf32>
    %108 = arith.maximumf %106, %107 : vector<8x8xf32>
    %cst_40 = arith.constant 9.99999996E-13 : f32
    %109 = vector.broadcast %cst_40 : f32 to vector<8x8xf32>
    %110 = arith.addf %108, %109 : vector<8x8xf32>
    %111 = math.sqrt %110 : vector<8x8xf32>
    %cst_41 = arith.constant 0.000000e+00 : f32
    %112 = vector.broadcast %cst_41 : f32 to vector<8x8xf32>
    %113 = arith.subf %112, %111 : vector<8x8xf32>
    %cst_42 = arith.constant 1.000000e+01 : f32
    %114 = vector.broadcast %cst_42 : f32 to vector<8x8xf32>
    %115 = arith.mulf %113, %114 : vector<8x8xf32>
    %116 = vector.shape_cast %1 : vector<8x19xf32> to vector<8x1x19xf32>
    %117 = vector.shape_cast %1 : vector<8x19xf32> to vector<1x8x19xf32>
    %118 = vector.broadcast %116 : vector<8x1x19xf32> to vector<8x8x19xf32>
    %119 = vector.broadcast %117 : vector<1x8x19xf32> to vector<8x8x19xf32>
    %120 = arith.subf %118, %119 : vector<8x8x19xf32>
    %121 = math.absf %120 : vector<8x8x19xf32>
    %cst_43 = arith.constant dense<0.000000e+00> : vector<8x8xf32>
    %122 = vector.multi_reduction <add>, %121, %cst_43 [2] : vector<8x8x19xf32> to vector<8x8xf32>
    %123 = tpu.iota {dimensions = array<i32: 0>} : vector<8x8xi32>
    %124 = tpu.iota {dimensions = array<i32: 1>} : vector<8x8xi32>
    %125 = arith.cmpi ne, %123, %124 : vector<8x8xi32>
    %cst_44 = arith.constant -1.000000e+30 : f32
    %126 = vector.broadcast %cst_44 : f32 to vector<8x8xf32>
    %127 = arith.select %125, %115, %126 : vector<8x8xi1>, vector<8x8xf32>
    %cst_45 = arith.constant dense<0xFF800000> : vector<8xf32>
    %128 = vector.multi_reduction <maximumf>, %127, %cst_45 [1] : vector<8x8xf32> to vector<8xf32>
    %129 = vector.shape_cast %128 : vector<8xf32> to vector<8x1xf32>
    %130 = vector.broadcast %129 : vector<8x1xf32> to vector<8x8xf32>
    %131 = arith.subf %115, %130 : vector<8x8xf32>
    %132 = math.exp %131 : vector<8x8xf32>
    %cst_46 = arith.constant 0.000000e+00 : f32
    %133 = vector.broadcast %cst_46 : f32 to vector<8x8xf32>
    %134 = arith.select %125, %132, %133 : vector<8x8xi1>, vector<8x8xf32>
    %135 = vector.shape_cast %122 : vector<8x8xf32> to vector<8x1x8xf32>
    %136 = vector.shape_cast %122 : vector<8x8xf32> to vector<8x8x1xf32>
    %137 = vector.broadcast %135 : vector<8x1x8xf32> to vector<8x8x8xf32>
    %138 = vector.broadcast %136 : vector<8x8x1xf32> to vector<8x8x8xf32>
    %139 = arith.cmpf oge, %137, %138 : vector<8x8x8xf32>
    %140 = arith.extui %139 : vector<8x8x8xi1> to vector<8x8x8xi32>
    %141 = arith.sitofp %140 : vector<8x8x8xi32> to vector<8x8x8xf32>
    %142 = vector.shape_cast %134 : vector<8x8xf32> to vector<8x1x8xf32>
    %143 = vector.broadcast %142 : vector<8x1x8xf32> to vector<8x8x8xf32>
    %144 = arith.mulf %141, %143 : vector<8x8x8xf32>
    %cst_47 = arith.constant dense<0.000000e+00> : vector<8x8xf32>
    %145 = vector.multi_reduction <add>, %144, %cst_47 [2] : vector<8x8x8xf32> to vector<8x8xf32>
    %cst_48 = arith.constant 9.99999996E-13 : f32
    %146 = vector.broadcast %cst_48 : f32 to vector<8x8xf32>
    %147 = arith.addf %145, %146 : vector<8x8xf32>
    %148 = math.log %147 : vector<8x8xf32>
    %149 = arith.subf %148, %131 : vector<8x8xf32>
    %cst_49 = arith.constant 0.000000e+00 : f32
    %150 = vector.broadcast %cst_49 : f32 to vector<8x8xf32>
    %151 = arith.select %125, %149, %150 : vector<8x8xi1>, vector<8x8xf32>
    %cst_50 = arith.constant dense<0.000000e+00> : vector<8xf32>
    %152 = vector.multi_reduction <add>, %151, %cst_50 [1] : vector<8x8xf32> to vector<8xf32>
    %153 = vector.shape_cast %152 : vector<8xf32> to vector<8x1xf32>
    %cst_51 = arith.constant 0.142857149 : f32
    %154 = vector.broadcast %cst_51 : f32 to vector<8x1xf32>
    %155 = arith.mulf %153, %154 : vector<8x1xf32>
    %cst_52 = arith.constant dense<0.000000e+00> : vector<1xf32>
    %156 = vector.multi_reduction <add>, %155, %cst_52 [0] : vector<8x1xf32> to vector<1xf32>
    %157 = vector.shape_cast %156 : vector<1xf32> to vector<1x1xf32>
    %cst_53 = arith.constant 1.250000e-01 : f32
    %158 = vector.broadcast %cst_53 : f32 to vector<1x1xf32>
    %159 = arith.mulf %157, %158 : vector<1x1xf32>
    %c0_54 = arith.constant 0 : index
    %c0_55 = arith.constant 0 : index
    %160 = vector.load %arg7[%c0_54, %c0_55] : memref<1x1xf32, #tpu.memory_space<vmem>>, vector<1x1xf32>
    tpu.vector_store %arg7[%c0_54, %c0_55], %159 {strides = array<i32>} : memref<1x1xf32, #tpu.memory_space<vmem>>, vector<1x1xf32>,
    return
  }
}

</mosaic_0001>

<llo_original>
// kernel: cell_loss.1
$region0: #{cell_loss.1}
  #allocation0 [shape = 'u32[]', space=smem, size = 0x4, offset = 0x4, fixed_abs, tag = 'smem constant byte address 0x4 - core index']
  #allocation1 [shape = 'u32[144,128]{1,0:T(1,128)}', space=vmem, size = 0x12000, scoped, tag = 'internal scratch']
  %s0 = inlined_call_operand.hbm [shape: f32[8,19], index: 0, kind: input, shape index: {}]
  %s1 = inlined_call_operand.hbm [shape: f32[8,19], index: 1, kind: input, shape index: {}]
  %s2 = inlined_call_operand.hbm [shape: f32[8,32], index: 2, kind: input, shape index: {}]
  %s3 = inlined_call_operand.vmem [shape: f32[1,19], index: 3, kind: input, shape index: {}]
  %s4 = inlined_call_operand.vmem [shape: f32[1,19], index: 4, kind: input, shape index: {}]
  %s5 = inlined_call_operand.hbm [shape: f32[1,1], index: 5, kind: output, shape index: {0}]
  %s6 = inlined_call_operand.hbm [shape: f32[1,1], index: 6, kind: output, shape index: {1}]
  %s7 = inlined_call_operand.hbm [shape: f32[1,1], index: 7, kind: output, shape index: {2}]
  %8 = xla_tuple %s5, %s6, %s7
  %s9 = sld [smem:[#allocation0]]
  $region58: #{cell_loss.1} parent=0
    _
  %s11 = ssub.s32 1, %s9
  %s12 = scalar_select 0, %s11, %s9
  $region1: #{cell_loss.1} parent=0
    #allocation2 [shape = 'u8[4096]{0}', space=vmem, size = 0x1000, scoped, tag = 'input window, operand 0, single buffered']
    #allocation3 [shape = 's32[1]{0}', space=sflag, size = 0x4, scoped, tag = 'scoped memory for cell_loss.1']
    #allocation4 [shape = 's32[1]{0}', space=sflag, size = 0x4, scoped, tag = 'scoped memory for cell_loss.1']
    #allocation5 [shape = 'u8[4096]{0}', space=vmem, size = 0x1000, scoped, tag = 'input window, operand 1, single buffered']
    #allocation6 [shape = 's32[1]{0}', space=sflag, size = 0x4, scoped, tag = 'scoped memory for cell_loss.1']
    #allocation7 [shape = 'u8[4096]{0}', space=vmem, size = 0x1000, scoped, tag = 'input window, operand 2, single buffered']
    #allocation8 [shape = 'u8[512]{0}', space=vmem, size = 0x400, scoped, tag = 'output window, operand 0, single buffered']
    #allocation9 [shape = 'u8[512]{0}', space=vmem, size = 0x400, scoped, tag = 'output window, operand 1, single buffered']
    #allocation10 [shape = 's32[1]{0}', space=sflag, size = 0x4, scoped, tag = 'scoped memory for cell_loss.1']
    #allocation11 [shape = 'u8[512]{0}', space=vmem, size = 0x400, scoped, tag = 'output window, operand 2, single buffered']
    %13 = vsyncpa [#allocation3], 0
    %14 = vsyncpa [#allocation6], 0
    %15 = vsyncpa [#allocation4], 0
    %16 = vsyncpa [#allocation10], 0
    // Predicated region
    $region2: #{cell_loss.1} parent=1 // pred_check
      _
    $region3: #{cell_loss.1} parent=1 // pred_check_branch
      %18 = sbr.rel (0) target = $region5
    $region4: #{cell_loss.1} parent=1 // pred_region
      %s20 = ssub.s32 128, 128
      %21 = vsyncadd [#allocation3], %s20
      %s23 = sshll.u32 [#allocation2], 4
      %s24 = int_to_ptr.vmem [resolvable:$true] %s23
      %26 = dma.hbm_to_vmem [thread:$0]  %s0, 128, %s24, [#allocation3]
    $region5: #{cell_loss.1} parent=1 // pred_fallthru
      _
    // Predicated region
    $region6: #{cell_loss.1} parent=1 // pred_check
      _
    $region7: #{cell_loss.1} parent=1 // pred_check_branch
      %28 = sbr.rel (0) target = $region9
    $region8: #{cell_loss.1} parent=1 // pred_region
      %s30 = ssub.s32 128, 128
      %31 = vsyncadd [#allocation6], %s30
      %s33 = sshll.u32 [#allocation5], 4
      %s34 = int_to_ptr.vmem [resolvable:$true] %s33
      %36 = dma.hbm_to_vmem [thread:$0]  %s1, 128, %s34, [#allocation6]
    $region9: #{cell_loss.1} parent=1 // pred_fallthru
      _
    // Predicated region
    $region10: #{cell_loss.1} parent=1 // pred_check
      _
    $region11: #{cell_loss.1} parent=1 // pred_check_branch
      %38 = sbr.rel (0) target = $region13
    $region12: #{cell_loss.1} parent=1 // pred_region
      %s40 = ssub.s32 128, 128
      %41 = vsyncadd [#allocation6], %s40
      %s43 = sshll.u32 [#allocation7], 4
      %s44 = int_to_ptr.vmem [resolvable:$true] %s43
      %46 = dma.hbm_to_vmem [thread:$0]  %s2, 128, %s44, [#allocation6]
    $region13: #{cell_loss.1} parent=1 // pred_fallthru
      _
    // Predicated region
    $region14: #{cell_loss.1} parent=1 // pred_check
      _
    $region15: #{cell_loss.1} parent=1 // pred_check_branch
      %48 = sbr.rel (0) target = $region17
    $region16: #{cell_loss.1} parent=1 // pred_region
      _
    $region17: #{cell_loss.1} parent=1 // pred_fallthru
      _
    // Predicated region
    $region18: #{cell_loss.1} parent=1 // pred_check
      _
    $region19: #{cell_loss.1} parent=1 // pred_check_branch
      %50 = sbr.rel (0) target = $region21
    $region20: #{cell_loss.1} parent=1 // pred_region
      _
    $region21: #{cell_loss.1} parent=1 // pred_fallthru
      _
    // Predicated region
    $region22: #{cell_loss.1} parent=1 // pred_check
      _
    $region23: #{cell_loss.1} parent=1 // pred_check_branch
      %52 = sbr.rel (0) target = $region25
    $region24: #{cell_loss.1} parent=1 // pred_region
      %53 = dma.done [#allocation3], 128
    $region25: #{cell_loss.1} parent=1 // pred_fallthru
      _
    // Predicated region
    $region26: #{cell_loss.1} parent=1 // pred_check
      _
    $region27: #{cell_loss.1} parent=1 // pred_check_branch
      %55 = sbr.rel (0) target = $region29
    $region28: #{cell_loss.1} parent=1 // pred_region
      %56 = dma.done [#allocation6], 128
    $region29: #{cell_loss.1} parent=1 // pred_fallthru
      _
    // Predicated region
    $region30: #{cell_loss.1} parent=1 // pred_check
      _
    $region31: #{cell_loss.1} parent=1 // pred_check_branch
      %58 = sbr.rel (0) target = $region33
    $region32: #{cell_loss.1} parent=1 // pred_region
      %59 = dma.done [#allocation6], 128
    $region33: #{cell_loss.1} parent=1 // pred_fallthru
      _
    %v60 = vld [vmem:[#allocation2] sm:$0xff]
    %v61 = vld [vmem:[#allocation5] sm:$0xff]
    %v62 = vld [vmem:[#allocation7] sm:$0xff]
    %v63 = vld [vmem:[%s3] sm:$0x1]
    %v64 = vld [vmem:[%s4] sm:$0x1]
    %v65 = vsub.f32 %v60, %v61
    %v66 = vmul.f32 %v65, %v65
    %vm67 = vcmask 154624
    %v68 = vsel %vm67, %v66, 0.0
    %v69 = vrot.slane %v68, 4
    %v70 = vadd.f32 %v68, %v69
    %v71 = vrot.slane %v70, 2
    %v72 = vadd.f32 %v70, %v71
    %v73 = vrot.slane %v72, 1
    %v74 = vadd.f32 %v72, %v73
    %v75 = vmul.f32 %v74, 0.125
    %v76 = vmul.f32 %v75, %v63
    %vm77 = vcmask 147456
    %v78 = vsel %vm77, %v76, 0.0
    %79 = vadd.xlane.f32.xlu0 %v78
    %v80 = vpop.xlane.xlu0 %79
    %v81 = vsel %vm77, %v63, 0.0
    %82 = vadd.xlane.f32.xlu0 %v81
    %v83 = vpop.xlane.xlu0 %82
    %v84 = vrcp.pop %v83
    %v85 = vmul.f32 %v80, %v84
    %vm86 = vcmask 0
    %87 = vst.msk [vmem:[#allocation8] sm:$0x1] %vm86, %v85
    %v88 = vlaneseq
    %v89 = vand.u32 %v88, 127
    %v90 = vand.u32 %v89, 63
    %v91 = vcvt.s32.f32 %v90
    %v92 = vmul.f32 %v91, 0.0952381
    %v93 = vadd.f32 %v92, -3.0
    %vm94 = vcmp.ge.s32.totalorder %v89, 64
    %v95 = vlaneseq
    %v96 = vshrl.u32 %v95, 7
    %v97 = vsub.s32 0, %v96
    %v98 = vrot.slane %v61, %v97
    %100 = vbcast.lane.b32.xlu0 %v98, 256
    %v101 = vpop.permute.xlu0 %100
    %s103 = sor.u32 256, 8
    %104 = vbcast.lane.b32.xlu0 %v98, %s103
    %v105 = vpop.permute.xlu0 %104
    %s107 = sor.u32 256, 16
    %108 = vbcast.lane.b32.xlu0 %v98, %s107
    %v109 = vpop.permute.xlu0 %108
    %v110 = vlaneseq
    %v111 = vshrl.u32 %v110, 7
    %v112 = vsub.s32 1, %v111
    %v113 = vrot.slane %v61, %v112
    %115 = vbcast.lane.b32.xlu0 %v113, 256
    %v116 = vpop.permute.xlu0 %115
    %s118 = sor.u32 256, 8
    %119 = vbcast.lane.b32.xlu0 %v113, %s118
    %v120 = vpop.permute.xlu0 %119
    %s122 = sor.u32 256, 16
    %123 = vbcast.lane.b32.xlu0 %v113, %s122
    %v124 = vpop.permute.xlu0 %123
    %v125 = vlaneseq
    %v126 = vshrl.u32 %v125, 7
    %v127 = vsub.s32 2, %v126
    %v128 = vrot.slane %v61, %v127
    %130 = vbcast.lane.b32.xlu0 %v128, 256
    %v131 = vpop.permute.xlu0 %130
    %s133 = sor.u32 256, 8
    %134 = vbcast.lane.b32.xlu0 %v128, %s133
    %v135 = vpop.permute.xlu0 %134
    %s137 = sor.u32 256, 16
    %138 = vbcast.lane.b32.xlu0 %v128, %s137
    %v139 = vpop.permute.xlu0 %138
    %v140 = vlaneseq
    %v141 = vshrl.u32 %v140, 7
    %v142 = vsub.s32 3, %v141
    %v143 = vrot.slane %v61, %v142
    %145 = vbcast.lane.b32.xlu0 %v143, 256
    %v146 = vpop.permute.xlu0 %145
    %s148 = sor.u32 256, 8
    %149 = vbcast.lane.b32.xlu0 %v143, %s148
    %v150 = vpop.permute.xlu0 %149
    %s152 = sor.u32 256, 16
    %153 = vbcast.lane.b32.xlu0 %v143, %s152
    %v154 = vpop.permute.xlu0 %153
    %v155 = vlaneseq
    %v156 = vshrl.u32 %v155, 7
    %v157 = vsub.s32 4, %v156
    %v158 = vrot.slane %v61, %v157
    %160 = vbcast.lane.b32.xlu0 %v158, 256
    %v161 = vpop.permute.xlu0 %160
    %s163 = sor.u32 256, 8
    %164 = vbcast.lane.b32.xlu0 %v158, %s163
    %v165 = vpop.permute.xlu0 %164
    %s167 = sor.u32 256, 16
    %168 = vbcast.lane.b32.xlu0 %v158, %s167
    %v169 = vpop.permute.xlu0 %168
    %v170 = vlaneseq
    %v171 = vshrl.u32 %v170, 7
    %v172 = vsub.s32 5, %v171
    %v173 = vrot.slane %v61, %v172
    %175 = vbcast.lane.b32.xlu0 %v173, 256
    %v176 = vpop.permute.xlu0 %175
    %s178 = sor.u32 256, 8
    %179 = vbcast.lane.b32.xlu0 %v173, %s178
    %v180 = vpop.permute.xlu0 %179
    %s182 = sor.u32 256, 16
    %183 = vbcast.lane.b32.xlu0 %v173, %s182
    %v184 = vpop.permute.xlu0 %183
    %v185 = vlaneseq
    %v186 = vshrl.u32 %v185, 7
    %v187 = vsub.s32 6, %v186
    %v188 = vrot.slane %v61, %v187
    %190 = vbcast.lane.b32.xlu0 %v188, 256
    %v191 = vpop.permute.xlu0 %190
    %s193 = sor.u32 256, 8
    %194 = vbcast.lane.b32.xlu0 %v188, %s193
    %v195 = vpop.permute.xlu0 %194
    %s197 = sor.u32 256, 16
    %198 = vbcast.lane.b32.xlu0 %v188, %s197
    %v199 = vpop.permute.xlu0 %198
    %v200 = vlaneseq
    %v201 = vshrl.u32 %v200, 7
    %v202 = vsub.s32 7, %v201
    %v203 = vrot.slane %v61, %v202
    %205 = vbcast.lane.b32.xlu0 %v203, 256
    %v206 = vpop.permute.xlu0 %205
    %s208 = sor.u32 256, 8
    %209 = vbcast.lane.b32.xlu0 %v203, %s208
    %v210 = vpop.permute.xlu0 %209
    %s212 = sor.u32 256, 16
    %213 = vbcast.lane.b32.xlu0 %v203, %s212
    %v214 = vpop.permute.xlu0 %213
    %v215 = vlaneseq
    %v216 = vshrl.u32 %v215, 7
    %v217 = vsub.s32 0, %v216
    %v218 = vrot.slane %v60, %v217
    %220 = vbcast.lane.b32.xlu0 %v218, 256
    %v221 = vpop.permute.xlu0 %220
    %s223 = sor.u32 256, 8
    %224 = vbcast.lane.b32.xlu0 %v218, %s223
    %v225 = vpop.permute.xlu0 %224
    %s227 = sor.u32 256, 16
    %228 = vbcast.lane.b32.xlu0 %v218, %s227
    %v229 = vpop.permute.xlu0 %228
    %v230 = vlaneseq
    %v231 = vshrl.u32 %v230, 7
    %v232 = vsub.s32 1, %v231
    %v233 = vrot.slane %v60, %v232
    %235 = vbcast.lane.b32.xlu0 %v233, 256
    %v236 = vpop.permute.xlu0 %235
    %s238 = sor.u32 256, 8
    %239 = vbcast.lane.b32.xlu0 %v233, %s238
    %v240 = vpop.permute.xlu0 %239
    %s242 = sor.u32 256, 16
    %243 = vbcast.lane.b32.xlu0 %v233, %s242
    %v244 = vpop.permute.xlu0 %243
    %v245 = vlaneseq
    %v246 = vshrl.u32 %v245, 7
    %v247 = vsub.s32 2, %v246
    %v248 = vrot.slane %v60, %v247
    %250 = vbcast.lane.b32.xlu0 %v248, 256
    %v251 = vpop.permute.xlu0 %250
    %s253 = sor.u32 256, 8
    %254 = vbcast.lane.b32.xlu0 %v248, %s253
    %v255 = vpop.permute.xlu0 %254
    %s257 = sor.u32 256, 16
    %258 = vbcast.lane.b32.xlu0 %v248, %s257
    %v259 = vpop.permute.xlu0 %258
    %v260 = vlaneseq
    %v261 = vshrl.u32 %v260, 7
    %v262 = vsub.s32 3, %v261
    %v263 = vrot.slane %v60, %v262
    %265 = vbcast.lane.b32.xlu0 %v263, 256
    %v266 = vpop.permute.xlu0 %265
    %s268 = sor.u32 256, 8
    %269 = vbcast.lane.b32.xlu0 %v263, %s268
    %v270 = vpop.permute.xlu0 %269
    %s272 = sor.u32 256, 16
    %273 = vbcast.lane.b32.xlu0 %v263, %s272
    %v274 = vpop.permute.xlu0 %273
    %v275 = vlaneseq
    %v276 = vshrl.u32 %v275, 7
    %v277 = vsub.s32 4, %v276
    %v278 = vrot.slane %v60, %v277
    %280 = vbcast.lane.b32.xlu0 %v278, 256
    %v281 = vpop.permute.xlu0 %280
    %s283 = sor.u32 256, 8
    %284 = vbcast.lane.b32.xlu0 %v278, %s283
    %v285 = vpop.permute.xlu0 %284
    %s287 = sor.u32 256, 16
    %288 = vbcast.lane.b32.xlu0 %v278, %s287
    %v289 = vpop.permute.xlu0 %288
    %v290 = vlaneseq
    %v291 = vshrl.u32 %v290, 7
    %v292 = vsub.s32 5, %v291
    %v293 = vrot.slane %v60, %v292
    %295 = vbcast.lane.b32.xlu0 %v293, 256
    %v296 = vpop.permute.xlu0 %295
    %s298 = sor.u32 256, 8
    %299 = vbcast.lane.b32.xlu0 %v293, %s298
    %v300 = vpop.permute.xlu0 %299
    %s302 = sor.u32 256, 16
    %303 = vbcast.lane.b32.xlu0 %v293, %s302
    %v304 = vpop.permute.xlu0 %303
    %v305 = vlaneseq
    %v306 = vshrl.u32 %v305, 7
    %v307 = vsub.s32 6, %v306
    %v308 = vrot.slane %v60, %v307
    %310 = vbcast.lane.b32.xlu0 %v308, 256
    %v311 = vpop.permute.xlu0 %310
    %s313 = sor.u32 256, 8
    %314 = vbcast.lane.b32.xlu0 %v308, %s313
    %v315 = vpop.permute.xlu0 %314
    %s317 = sor.u32 256, 16
    %318 = vbcast.lane.b32.xlu0 %v308, %s317
    %v319 = vpop.permute.xlu0 %318
    %v320 = vlaneseq
    %v321 = vshrl.u32 %v320, 7
    %v322 = vsub.s32 7, %v321
    %v323 = vrot.slane %v60, %v322
    %325 = vbcast.lane.b32.xlu0 %v323, 256
    %v326 = vpop.permute.xlu0 %325
    %s328 = sor.u32 256, 8
    %329 = vbcast.lane.b32.xlu0 %v323, %s328
    %v330 = vpop.permute.xlu0 %329
    %s332 = sor.u32 256, 16
    %333 = vbcast.lane.b32.xlu0 %v323, %s332
    %v334 = vpop.permute.xlu0 %333
    %v335 = vsel %vm94, 1, 0
    %vm336 = vcmp.eq.s32.totalorder %v335, 1
    %v337 = vsel %vm336, %v101, %v221
    %v338 = vsel %vm336, %v105, %v225
    %v339 = vsel %vm336, %v109, %v229
    %v340 = vsel %vm336, %v116, %v236
    %v341 = vsel %vm336, %v120, %v240
    %v342 = vsel %vm336, %v124, %v244
    %v343 = vsel %vm336, %v131, %v251
    %v344 = vsel %vm336, %v135, %v255
    %v345 = vsel %vm336, %v139, %v259
    %v346 = vsel %vm336, %v146, %v266
    %v347 = vsel %vm336, %v150, %v270
    %v348 = vsel %vm336, %v154, %v274
    %v349 = vsel %vm336, %v161, %v281
    %v350 = vsel %vm336, %v165, %v285
    %v351 = vsel %vm336, %v169, %v289
    %v352 = vsel %vm336, %v176, %v296
    %v353 = vsel %vm336, %v180, %v300
    %v354 = vsel %vm336, %v184, %v304
    %v355 = vsel %vm336, %v191, %v311
    %v356 = vsel %vm336, %v195, %v315
    %v357 = vsel %vm336, %v199, %v319
    %v358 = vsel %vm336, %v206, %v326
    %v359 = vsel %vm336, %v210, %v330
    %v360 = vsel %vm336, %v214, %v334
    %v361 = vsub.f32 %v337, %v93
    %v362 = vsub.f32 %v338, %v93
    %v363 = vsub.f32 %v339, %v93
    %v364 = vsub.f32 %v340, %v93
    %v365 = vsub.f32 %v341, %v93
    %v366 = vsub.f32 %v342, %v93
    %v367 = vsub.f32 %v343, %v93
    %v368 = vsub.f32 %v344, %v93
    %v369 = vsub.f32 %v345, %v93
    %v370 = vsub.f32 %v346, %v93
    %v371 = vsub.f32 %v347, %v93
    %v372 = vsub.f32 %v348, %v93
    %v373 = vsub.f32 %v349, %v93
    %v374 = vsub.f32 %v350, %v93
    %v375 = vsub.f32 %v351, %v93
    %v376 = vsub.f32 %v352, %v93
    %v377 = vsub.f32 %v353, %v93
    %v378 = vsub.f32 %v354, %v93
    %v379 = vsub.f32 %v355, %v93
    %v380 = vsub.f32 %v356, %v93
    %v381 = vsub.f32 %v357, %v93
    %v382 = vsub.f32 %v358, %v93
    %v383 = vsub.f32 %v359, %v93
    %v384 = vsub.f32 %v360, %v93
    %v385 = vmul.f32 %v361, 5.3333335
    %v386 = vmul.f32 %v362, 5.3333335
    %v387 = vmul.f32 %v363, 5.3333335
    %v388 = vmul.f32 %v364, 5.3333335
    %v389 = vmul.f32 %v365, 5.3333335
    %v390 = vmul.f32 %v366, 5.3333335
    %v391 = vmul.f32 %v367, 5.3333335
    %v392 = vmul.f32 %v368, 5.3333335
    %v393 = vmul.f32 %v369, 5.3333335
    %v394 = vmul.f32 %v370, 5.3333335
    %v395 = vmul.f32 %v371, 5.3333335
    %v396 = vmul.f32 %v372, 5.3333335
    %v397 = vmul.f32 %v373, 5.3333335
    %v398 = vmul.f32 %v374, 5.3333335
    %v399 = vmul.f32 %v375, 5.3333335
    %v400 = vmul.f32 %v376, 5.3333335
    %v401 = vmul.f32 %v377, 5.3333335
    %v402 = vmul.f32 %v378, 5.3333335
    %v403 = vmul.f32 %v379, 5.3333335
    %v404 = vmul.f32 %v380, 5.3333335
    %v405 = vmul.f32 %v381, 5.3333335
    %v406 = vmul.f32 %v382, 5.3333335
    %v407 = vmul.f32 %v383, 5.3333335
    %v408 = vmul.f32 %v384, 5.3333335
    %v409 = vmul.f32 %v385, -0.5
    %v410 = vmul.f32 %v386, -0.5
    %v411 = vmul.f32 %v387, -0.5
    %v412 = vmul.f32 %v388, -0.5
    %v413 = vmul.f32 %v389, -0.5
    %v414 = vmul.f32 %v390, -0.5
    %v415 = vmul.f32 %v391, -0.5
    %v416 = vmul.f32 %v392, -0.5
    %v417 = vmul.f32 %v393, -0.5
    %v418 = vmul.f32 %v394, -0.5
    %v419 = vmul.f32 %v395, -0.5
    %v420 = vmul.f32 %v396, -0.5
    %v421 = vmul.f32 %v397, -0.5
    %v422 = vmul.f32 %v398, -0.5
    %v423 = vmul.f32 %v399, -0.5
    %v424 = vmul.f32 %v400, -0.5
    %v425 = vmul.f32 %v401, -0.5
    %v426 = vmul.f32 %v402, -0.5
    %v427 = vmul.f32 %v403, -0.5
    %v428 = vmul.f32 %v404, -0.5
    %v429 = vmul.f32 %v405, -0.5
    %v430 = vmul.f32 %v406, -0.5
    %v431 = vmul.f32 %v407, -0.5
    %v432 = vmul.f32 %v408, -0.5
    %v433 = vmul.f32 %v409, %v385
    %v434 = vmul.f32 %v410, %v386
    %v435 = vmul.f32 %v411, %v387
    %v436 = vmul.f32 %v412, %v388
    %v437 = vmul.f32 %v413, %v389
    %v438 = vmul.f32 %v414, %v390
    %v439 = vmul.f32 %v415, %v391
    %v440 = vmul.f32 %v416, %v392
    %v441 = vmul.f32 %v417, %v393
    %v442 = vmul.f32 %v418, %v394
    %v443 = vmul.f32 %v419, %v395
    %v444 = vmul.f32 %v420, %v396
    %v445 = vmul.f32 %v421, %v397
    %v446 = vmul.f32 %v422, %v398
    %v447 = vmul.f32 %v423, %v399
    %v448 = vmul.f32 %v424, %v400
    %v449 = vmul.f32 %v425, %v401
    %v450 = vmul.f32 %v426, %v402
    %v451 = vmul.f32 %v427, %v403
    %v452 = vmul.f32 %v428, %v404
    %v453 = vmul.f32 %v429, %v405
    %v454 = vmul.f32 %v430, %v406
    %v455 = vmul.f32 %v431, %v407
    %v456 = vmul.f32 %v432, %v408
    %v457 = vmul.f32 %v433, 1.442695
    %v458 = vpow.pop %v457
    %v459 = vmul.f32 %v434, 1.442695
    %v460 = vpow.pop %v459
    %v461 = vmul.f32 %v435, 1.442695
    %v462 = vpow.pop %v461
    %v463 = vmul.f32 %v436, 1.442695
    %v464 = vpow.pop %v463
    %v465 = vmul.f32 %v437, 1.442695
    %v466 = vpow.pop %v465
    %v467 = vmul.f32 %v438, 1.442695
    %v468 = vpow.pop %v467
    %v469 = vmul.f32 %v439, 1.442695
    %v470 = vpow.pop %v469
    %v471 = vmul.f32 %v440, 1.442695
    %v472 = vpow.pop %v471
    %v473 = vmul.f32 %v441, 1.442695
    %v474 = vpow.pop %v473
    %v475 = vmul.f32 %v442, 1.442695
    %v476 = vpow.pop %v475
    %v477 = vmul.f32 %v443, 1.442695
    %v478 = vpow.pop %v477
    %v479 = vmul.f32 %v444, 1.442695
    %v480 = vpow.pop %v479
    %v481 = vmul.f32 %v445, 1.442695
    %v482 = vpow.pop %v481
    %v483 = vmul.f32 %v446, 1.442695
    %v484 = vpow.pop %v483
    %v485 = vmul.f32 %v447, 1.442695
    %v486 = vpow.pop %v485
    %v487 = vmul.f32 %v448, 1.442695
    %v488 = vpow.pop %v487
    %v489 = vmul.f32 %v449, 1.442695
    %v490 = vpow.pop %v489
    %v491 = vmul.f32 %v450, 1.442695
    %v492 = vpow.pop %v491
    %v493 = vmul.f32 %v451, 1.442695
    %v494 = vpow.pop %v493
    %v495 = vmul.f32 %v452, 1.442695
    %v496 = vpow.pop %v495
    %v497 = vmul.f32 %v453, 1.442695
    %v498 = vpow.pop %v497
    %v499 = vmul.f32 %v454, 1.442695
    %v500 = vpow.pop %v499
    %v501 = vmul.f32 %v455, 1.442695
    %v502 = vpow.pop %v501
    %v503 = vmul.f32 %v456, 1.442695
    %v504 = vpow.pop %v503
    %v505 = vadd.f32 %v458, %v464
    %v506 = vadd.f32 %v505, %v470
    %v507 = vadd.f32 %v506, %v476
    %v508 = vadd.f32 %v507, %v482
    %v509 = vadd.f32 %v508, %v488
    %v510 = vadd.f32 %v509, %v494
    %v511 = vadd.f32 %v510, %v500
    %v512 = vadd.f32 %v460, %v466
    %v513 = vadd.f32 %v512, %v472
    %v514 = vadd.f32 %v513, %v478
    %v515 = vadd.f32 %v514, %v484
    %v516 = vadd.f32 %v515, %v490
    %v517 = vadd.f32 %v516, %v496
    %v518 = vadd.f32 %v517, %v502
    %vm519 = vcmask 1042432
    %v520 = vsel %vm519, %v462, 0.0
    %v521 = vsel %vm519, %v468, 0.0
    %v522 = vadd.f32 %v520, %v521
    %v523 = vsel %vm519, %v474, 0.0
    %v524 = vadd.f32 %v522, %v523
    %v525 = vsel %vm519, %v480, 0.0
    %v526 = vadd.f32 %v524, %v525
    %v527 = vsel %vm519, %v486, 0.0
    %v528 = vadd.f32 %v526, %v527
    %v529 = vsel %vm519, %v492, 0.0
    %v530 = vadd.f32 %v528, %v529
    %v531 = vsel %vm519, %v498, 0.0
    %v532 = vadd.f32 %v530, %v531
    %v533 = vsel %vm519, %v504, 0.0
    %v534 = vadd.f32 %v532, %v533
    %v535 = vcvt.s32.f32 %v335
    %v536 = vmul.f32 %v511, %v535
    %v537 = vmul.f32 %v518, %v535
    %v538 = vmul.f32 %v534, %v535
    %539 = vadd.xlane.f32.xlu0 %v536
    %v540 = vpop.xlane.xlu0 %539
    %541 = vadd.xlane.f32.xlu0 %v537
    %v542 = vpop.xlane.xlu0 %541
    %v543 = vsel %vm519, %v538, 0.0
    %544 = vadd.xlane.f32.xlu0 %v543
    %v545 = vpop.xlane.xlu0 %544
    %v546 = vsub.f32 1.0, %v535
    %v547 = vmul.f32 %v511, %v546
    %v548 = vmul.f32 %v518, %v546
    %v549 = vmul.f32 %v534, %v546
    %550 = vadd.xlane.f32.xlu0 %v547
    %v551 = vpop.xlane.xlu0 %550
    %552 = vadd.xlane.f32.xlu0 %v548
    %v553 = vpop.xlane.xlu0 %552
    %v554 = vsel %vm519, %v549, 0.0
    %555 = vadd.xlane.f32.xlu0 %v554
    %v556 = vpop.xlane.xlu0 %555
    %v557 = vsel %vm336, %v540, %v551
    %v558 = vsel %vm336, %v542, %v553
    %v559 = vsel %vm336, %v545, %v556
    %v560 = vadd.f32 %v557, 1e-12
    %v561 = vadd.f32 %v558, 1e-12
    %v562 = vadd.f32 %v559, 1e-12
    %v563 = vrcp.pop %v560
    %v564 = vmul.f32 %v511, %v563
    %v565 = vrcp.pop %v561
    %v566 = vmul.f32 %v518, %v565
    %v567 = vrcp.pop %v562
    %v568 = vmul.f32 %v534, %v567
    %v569 = vlaneseq
    %v570 = vshrl.u32 %v569, 7
    %v571 = vadd.s32 %v570, 8
    %v572 = vadd.s32 %v570, 16
    %v573 = vadd.s32 %v570, 24
    %v574 = vadd.s32 %v570, 32
    %v575 = vadd.s32 %v570, 40
    %v576 = vadd.s32 %v570, 48
    %v577 = vadd.s32 %v570, 56
    %v578 = vadd.s32 %v570, 64
    %v579 = vadd.s32 %v570, 72
    %v580 = vadd.s32 %v570, 80
    %v581 = vadd.s32 %v570, 88
    %v582 = vadd.s32 %v570, 96
    %v583 = vadd.s32 %v570, 104
    %v584 = vadd.s32 %v570, 112
    %v585 = vadd.s32 %v570, 120
    %vm586 = vcmp.ge.s32.totalorder %v570, 64
    %vm587 = vcmp.ge.s32.totalorder %v571, 64
    %vm588 = vcmp.ge.s32.totalorder %v572, 64
    %vm589 = vcmp.ge.s32.totalorder %v573, 64
    %vm590 = vcmp.ge.s32.totalorder %v574, 64
    %vm591 = vcmp.ge.s32.totalorder %v575, 64
    %vm592 = vcmp.ge.s32.totalorder %v576, 64
    %vm593 = vcmp.ge.s32.totalorder %v577, 64
    %vm594 = vcmp.ge.s32.totalorder %v578, 64
    %vm595 = vcmp.ge.s32.totalorder %v579, 64
    %vm596 = vcmp.ge.s32.totalorder %v580, 64
    %vm597 = vcmp.ge.s32.totalorder %v581, 64
    %vm598 = vcmp.ge.s32.totalorder %v582, 64
    %vm599 = vcmp.ge.s32.totalorder %v583, 64
    %vm600 = vcmp.ge.s32.totalorder %v584, 64
    %vm601 = vcmp.ge.s32.totalorder %v585, 64
    %vm602 = vmxor %vm586, %vm94
    %vm603 = vmxor %vm587, %vm94
    %vm604 = vmxor %vm588, %vm94
    %vm605 = vmxor %vm589, %vm94
    %vm606 = vmxor %vm590, %vm94
    %vm607 = vmxor %vm591, %vm94
    %vm608 = vmxor %vm592, %vm94
    %vm609 = vmxor %vm593, %vm94
    %vm610 = vmxor %vm594, %vm94
    %vm611 = vmxor %vm595, %vm94
    %vm612 = vmxor %vm596, %vm94
    %vm613 = vmxor %vm597, %vm94
    %vm614 = vmxor %vm598, %vm94
    %vm615 = vmxor %vm599, %vm94
    %vm616 = vmxor %vm600, %vm94
    %vm617 = vmxor %vm601, %vm94
    %vm618 = vmxor %vm602, 1
    %vm619 = vmxor %vm603, 1
    %vm620 = vmxor %vm604, 1
    %vm621 = vmxor %vm605, 1
    %vm622 = vmxor %vm606, 1
    %vm623 = vmxor %vm607, 1
    %vm624 = vmxor %vm608, 1
    %vm625 = vmxor %vm609, 1
    %vm626 = vmxor %vm610, 1
    %vm627 = vmxor %vm611, 1
    %vm628 = vmxor %vm612, 1
    %vm629 = vmxor %vm613, 1
    %vm630 = vmxor %vm614, 1
    %vm631 = vmxor %vm615, 1
    %vm632 = vmxor %vm616, 1
    %vm633 = vmxor %vm617, 1
    %vm634 = vcmp.le.s32.totalorder %v570, %v89
    %vm635 = vcmp.le.s32.totalorder %v571, %v89
    %vm636 = vcmp.le.s32.totalorder %v572, %v89
    %vm637 = vcmp.le.s32.totalorder %v573, %v89
    %vm638 = vcmp.le.s32.totalorder %v574, %v89
    %vm639 = vcmp.le.s32.totalorder %v575, %v89
    %vm640 = vcmp.le.s32.totalorder %v576, %v89
    %vm641 = vcmp.le.s32.totalorder %v577, %v89
    %vm642 = vcmp.le.s32.totalorder %v578, %v89
    %vm643 = vcmp.le.s32.totalorder %v579, %v89
    %vm644 = vcmp.le.s32.totalorder %v580, %v89
    %vm645 = vcmp.le.s32.totalorder %v581, %v89
    %vm646 = vcmp.le.s32.totalorder %v582, %v89
    %vm647 = vcmp.le.s32.totalorder %v583, %v89
    %vm648 = vcmp.le.s32.totalorder %v584, %v89
    %vm649 = vcmp.le.s32.totalorder %v585, %v89
    %vm650 = vmand %vm634, %vm618
    %vm651 = vmand %vm635, %vm619
    %vm652 = vmand %vm636, %vm620
    %vm653 = vmand %vm637, %vm621
    %vm654 = vmand %vm638, %vm622
    %vm655 = vmand %vm639, %vm623
    %vm656 = vmand %vm640, %vm624
    %vm657 = vmand %vm641, %vm625
    %vm658 = vmand %vm642, %vm626
    %vm659 = vmand %vm643, %vm627
    %vm660 = vmand %vm644, %vm628
    %vm661 = vmand %vm645, %vm629
    %vm662 = vmand %vm646, %vm630
    %vm663 = vmand %vm647, %vm631
    %vm664 = vmand %vm648, %vm632
    %vm665 = vmand %vm649, %vm633
    %v666 = vsel %vm650, 1.0, 0.0
    %v667 = vsel %vm651, 1.0, 0.0
    %v668 = vsel %vm652, 1.0, 0.0
    %v669 = vsel %vm653, 1.0, 0.0
    %v670 = vsel %vm654, 1.0, 0.0
    %v671 = vsel %vm655, 1.0, 0.0
    %v672 = vsel %vm656, 1.0, 0.0
    %v673 = vsel %vm657, 1.0, 0.0
    %v674 = vsel %vm658, 1.0, 0.0
    %v675 = vsel %vm659, 1.0, 0.0
    %v676 = vsel %vm660, 1.0, 0.0
    %v677 = vsel %vm661, 1.0, 0.0
    %v678 = vsel %vm662, 1.0, 0.0
    %v679 = vsel %vm663, 1.0, 0.0
    %v680 = vsel %vm664, 1.0, 0.0
    %v681 = vsel %vm665, 1.0, 0.0
    %682 = vmatprep.subr.mxu0 0.0
    %683 = vmatpush1.msra.mxu0 %v681
    %684 = vmatprep.subr.mxu0 0.0
    %685 = vmatpush1.msra.mxu0 %v680
    %686 = vmatprep.subr.mxu0 0.0
    %687 = vmatpush1.msra.mxu0 %v679
    %688 = vmatprep.subr.mxu0 0.0
    %689 = vmatpush1.msra.mxu0 %v678
    %690 = vmatprep.subr.mxu0 0.0
    %691 = vmatpush1.msra.mxu0 %v677
    %692 = vmatprep.subr.mxu0 0.0
    %693 = vmatpush1.msra.mxu0 %v676
    %694 = vmatprep.subr.mxu0 0.0
    %695 = vmatpush1.msra.mxu0 %v675
    %696 = vmatprep.subr.mxu0 0.0
    %697 = vmatpush1.msra.mxu0 %v674
    %698 = vmatprep.subr.mxu0 0.0
    %699 = vmatpush1.msra.mxu0 %v673
    %700 = vmatprep.subr.mxu0 0.0
    %701 = vmatpush1.msra.mxu0 %v672
    %702 = vmatprep.subr.mxu0 0.0
    %703 = vmatpush1.msra.mxu0 %v671
    %704 = vmatprep.subr.mxu0 0.0
    %705 = vmatpush1.msra.mxu0 %v670
    %706 = vmatprep.subr.mxu0 0.0
    %707 = vmatpush1.msra.mxu0 %v669
    %708 = vmatprep.subr.mxu0 0.0
    %709 = vmatpush1.msra.mxu0 %v668
    %710 = vmatprep.subr.mxu0 0.0
    %711 = vmatpush1.msra.mxu0 %v667
    %712 = vmatprep.subr.mxu0 0.0
    %713 = vmatpush1.msra.mxu0 %v666
    %714 = vmatprep.subr.mxu0 0.0
    %715 = vmatpush2.msra.mxu0 0.0
    %716 = vmatprep.subr.mxu0 0.0
    %717 = vmatpush2.msra.mxu0 0.0
    %718 = vmatprep.subr.mxu0 0.0
    %719 = vmatpush2.msra.mxu0 0.0
    %720 = vmatprep.subr.mxu0 0.0
    %721 = vmatpush2.msra.mxu0 0.0
    %722 = vmatprep.subr.mxu0 0.0
    %723 = vmatpush2.msra.mxu0 0.0
    %724 = vmatprep.subr.mxu0 0.0
    %725 = vmatpush2.msra.mxu0 0.0
    %726 = vmatprep.subr.mxu0 0.0
    %727 = vmatpush2.msra.mxu0 0.0
    %728 = vmatprep.subr.mxu0 0.0
    %729 = vmatpush2.msra.mxu0 0.0
    %730 = vmatprep.subr.mxu0 0.0
    %731 = vmatpush2.msra.mxu0 0.0
    %732 = vmatprep.subr.mxu0 0.0
    %733 = vmatpush2.msra.mxu0 0.0
    %734 = vmatprep.subr.mxu0 0.0
    %735 = vmatpush2.msra.mxu0 0.0
    %736 = vmatprep.subr.mxu0 0.0
    %737 = vmatpush2.msra.mxu0 0.0
    %738 = vmatprep.subr.mxu0 0.0
    %739 = vmatpush2.msra.mxu0 0.0
    %740 = vmatprep.subr.mxu0 0.0
    %741 = vmatpush2.msra.mxu0 0.0
    %742 = vmatprep.subr.mxu0 0.0
    %743 = vmatpush2.msra.mxu0 0.0
    %744 = vmatprep.subr.mxu0 0.0
    %745 = vmatpush2.msra.mxu0 0.0
    %746 = vmatprep.mubr.f32.mxu0 0.0
    %747 = vmatmul.mubr.f32.gmra.mxu0 %v564
    %v748 = vpop.f32.mrf.mxu0
    %v749 = vadd.f32 0.0, %v748
    %v750 = vpop.f32.mrf.mxu0
    %751 = vmatprep.mubr.f32.mxu0 0.0
    %752 = vmatmul.mubr.f32.gmra.mxu0 %v566
    %v753 = vpop.f32.mrf.mxu0
    %v754 = vadd.f32 0.0, %v753
    %v755 = vpop.f32.mrf.mxu0
    %756 = vmatprep.mubr.f32.mxu0 0.0
    %757 = vmatmul.mubr.f32.gmra.mxu0 %v568
    %v758 = vpop.f32.mrf.mxu0
    %v759 = vadd.f32 0.0, %v758
    %v760 = vpop.f32.mrf.mxu0
    %761 = vdwg.mxu0
    %762 = vrot.lane.b32.xlu0 %v749, 64
    %v763 = vpop.permute.xlu0 %762
    %764 = vrot.lane.b32.xlu0 %v754, 64
    %v765 = vpop.permute.xlu0 %764
    %766 = vrot.lane.b32.xlu0 %v759, 64
    %v767 = vpop.permute.xlu0 %766
    %v768 = vsub.f32 %v749, %v763
    %v769 = vsub.f32 %v754, %v765
    %v770 = vsub.f32 %v759, %v767
    %v771 = vand.u32 2147483647, %v768
    %v772 = vand.u32 2147483647, %v769
    %v773 = vand.u32 2147483647, %v770
    %v775 = vsel %vm67, %v64, 0
    %v778 = vsel %vm519, %v773, 0
    %780 = vmatprep.subr.mxu0 0.0
    %781 = vmatpush1.msra.mxu0 0.0
    %782 = vmatprep.subr.mxu0 0.0
    %783 = vmatpush1.msra.mxu0 0.0
    %784 = vmatprep.subr.mxu0 0.0
    %785 = vmatpush1.msra.mxu0 0.0
    %786 = vmatprep.subr.mxu0 0.0
    %787 = vmatpush1.msra.mxu0 0.0
    %788 = vmatprep.subr.mxu0 0.0
    %789 = vmatpush1.msra.mxu0 0.0
    %790 = vmatprep.subr.mxu0 0.0
    %791 = vmatpush1.msra.mxu0 0.0
    %792 = vmatprep.subr.mxu0 0.0
    %793 = vmatpush1.msra.mxu0 0.0
    %794 = vmatprep.subr.mxu0 0.0
    %795 = vmatpush1.msra.mxu0 0.0
    %796 = vmatprep.subr.mxu0 0.0
    %797 = vmatpush1.msra.mxu0 0.0
    %798 = vmatprep.subr.mxu0 0.0
    %799 = vmatpush1.msra.mxu0 0.0
    %800 = vmatprep.subr.mxu0 0.0
    %801 = vmatpush1.msra.mxu0 0.0
    %802 = vmatprep.subr.mxu0 0.0
    %803 = vmatpush1.msra.mxu0 0.0
    %804 = vmatprep.subr.mxu0 0.0
    %805 = vmatpush1.msra.mxu0 0.0
    %806 = vmatprep.subr.mxu0 0.0
    %807 = vmatpush1.msra.mxu0 %v778
    %808 = vmatprep.subr.mxu0 0.0
    %809 = vmatpush1.msra.mxu0 %v772
    %810 = vmatprep.subr.mxu0 0.0
    %811 = vmatpush1.msra.mxu0 %v771
    %812 = vmatprep.subr.mxu0 0.0
    %813 = vmatpush2.msra.mxu0 0.0
    %814 = vmatprep.subr.mxu0 0.0
    %815 = vmatpush2.msra.mxu0 0.0
    %816 = vmatprep.subr.mxu0 0.0
    %817 = vmatpush2.msra.mxu0 0.0
    %818 = vmatprep.subr.mxu0 0.0
    %819 = vmatpush2.msra.mxu0 0.0
    %820 = vmatprep.subr.mxu0 0.0
    %821 = vmatpush2.msra.mxu0 0.0
    %822 = vmatprep.subr.mxu0 0.0
    %823 = vmatpush2.msra.mxu0 0.0
    %824 = vmatprep.subr.mxu0 0.0
    %825 = vmatpush2.msra.mxu0 0.0
    %826 = vmatprep.subr.mxu0 0.0
    %827 = vmatpush2.msra.mxu0 0.0
    %828 = vmatprep.subr.mxu0 0.0
    %829 = vmatpush2.msra.mxu0 0.0
    %830 = vmatprep.subr.mxu0 0.0
    %831 = vmatpush2.msra.mxu0 0.0
    %832 = vmatprep.subr.mxu0 0.0
    %833 = vmatpush2.msra.mxu0 0.0
    %834 = vmatprep.subr.mxu0 0.0
    %835 = vmatpush2.msra.mxu0 0.0
    %836 = vmatprep.subr.mxu0 0.0
    %837 = vmatpush2.msra.mxu0 0.0
    %838 = vmatprep.subr.mxu0 0.0
    %839 = vmatpush2.msra.mxu0 0.0
    %840 = vmatprep.subr.mxu0 0.0
    %841 = vmatpush2.msra.mxu0 0.0
    %842 = vmatprep.subr.mxu0 0.0
    %843 = vmatpush2.msra.mxu0 0.0
    %844 = vmatprep.mubr.f32.mxu0 0.0
    %845 = vmatmul.mubr.f32.gmra.mxu0 %v775
    %v846 = vpop.f32.mrf.mxu0
    %v847 = vadd.f32 0.0, %v846
    %v848 = vpop.f32.mrf.mxu0
    %849 = vdwg.mxu0
    %vm850 = vcmask 1040384
    %v851 = vsel %vm850, %v847, 0.0
    %852 = vadd.xlane.f32.xlu0 %v851
    %v853 = vpop.xlane.xlu0 %852
    %v854 = vmul.f32 %v853, 0.046875
    %v855 = vsel %vm77, %v64, 0.0
    %856 = vadd.xlane.f32.xlu0 %v855
    %v857 = vpop.xlane.xlu0 %856
    %v858 = vrcp.pop %v857
    %v859 = vmul.f32 %v854, %v858
    %860 = vst.msk [vmem:[#allocation9] sm:$0x1] %vm86, %v859
    %v861 = vmul.f32 %v62, %v62
    %vm862 = vcmask 261120
    %v863 = vsel %vm862, %v861, 0.0
    %864 = vadd.xlane.f32.xlu0 %v863
    %v865 = vpop.xlane.xlu0 %864
    %v867 = vsel %vm862, %v62, 0
    %869 = vmatprep.subr.mxu0 0.0
    %870 = vmatpush1.xpose.msra.mxu0 0.0
    %871 = vmatprep.subr.mxu0 0.0
    %872 = vmatpush1.xpose.msra.mxu0 0.0
    %873 = vmatprep.subr.mxu0 0.0
    %874 = vmatpush1.xpose.msra.mxu0 0.0
    %875 = vmatprep.subr.mxu0 0.0
    %876 = vmatpush1.xpose.msra.mxu0 0.0
    %877 = vmatprep.subr.mxu0 0.0
    %878 = vmatpush1.xpose.msra.mxu0 0.0
    %879 = vmatprep.subr.mxu0 0.0
    %880 = vmatpush1.xpose.msra.mxu0 0.0
    %881 = vmatprep.subr.mxu0 0.0
    %882 = vmatpush1.xpose.msra.mxu0 0.0
    %883 = vmatprep.subr.mxu0 0.0
    %884 = vmatpush1.xpose.msra.mxu0 0.0
    %885 = vmatprep.subr.mxu0 0.0
    %886 = vmatpush1.xpose.msra.mxu0 0.0
    %887 = vmatprep.subr.mxu0 0.0
    %888 = vmatpush1.xpose.msra.mxu0 0.0
    %889 = vmatprep.subr.mxu0 0.0
    %890 = vmatpush1.xpose.msra.mxu0 0.0
    %891 = vmatprep.subr.mxu0 0.0
    %892 = vmatpush1.xpose.msra.mxu0 0.0
    %893 = vmatprep.subr.mxu0 0.0
    %894 = vmatpush1.xpose.msra.mxu0 0.0
    %895 = vmatprep.subr.mxu0 0.0
    %896 = vmatpush1.xpose.msra.mxu0 0.0
    %897 = vmatprep.subr.mxu0 0.0
    %898 = vmatpush1.xpose.msra.mxu0 0.0
    %899 = vmatprep.subr.mxu0 0.0
    %900 = vmatpush1.xpose.msra.mxu0 %v867
    %901 = vmatprep.subr.mxu0 0.0
    %902 = vmatpush2.xpose.msra.mxu0 0.0
    %903 = vmatprep.subr.mxu0 0.0
    %904 = vmatpush2.xpose.msra.mxu0 0.0
    %905 = vmatprep.subr.mxu0 0.0
    %906 = vmatpush2.xpose.msra.mxu0 0.0
    %907 = vmatprep.subr.mxu0 0.0
    %908 = vmatpush2.xpose.msra.mxu0 0.0
    %909 = vmatprep.subr.mxu0 0.0
    %910 = vmatpush2.xpose.msra.mxu0 0.0
    %911 = vmatprep.subr.mxu0 0.0
    %912 = vmatpush2.xpose.msra.mxu0 0.0
    %913 = vmatprep.subr.mxu0 0.0
    %914 = vmatpush2.xpose.msra.mxu0 0.0
    %915 = vmatprep.subr.mxu0 0.0
    %916 = vmatpush2.xpose.msra.mxu0 0.0
    %917 = vmatprep.subr.mxu0 0.0
    %918 = vmatpush2.xpose.msra.mxu0 0.0
    %919 = vmatprep.subr.mxu0 0.0
    %920 = vmatpush2.xpose.msra.mxu0 0.0
    %921 = vmatprep.subr.mxu0 0.0
    %922 = vmatpush2.xpose.msra.mxu0 0.0
    %923 = vmatprep.subr.mxu0 0.0
    %924 = vmatpush2.xpose.msra.mxu0 0.0
    %925 = vmatprep.subr.mxu0 0.0
    %926 = vmatpush2.xpose.msra.mxu0 0.0
    %927 = vmatprep.subr.mxu0 0.0
    %928 = vmatpush2.xpose.msra.mxu0 0.0
    %929 = vmatprep.subr.mxu0 0.0
    %930 = vmatpush2.xpose.msra.mxu0 0.0
    %931 = vmatprep.subr.mxu0 0.0
    %932 = vmatpush2.xpose.msra.mxu0 0.0
    %933 = vmatprep.mubr.f32.mxu0 0.0
    %934 = vmatmul.mubr.f32.gmra.mxu0 %v867
    %v935 = vpop.f32.mrf.mxu0
    %v936 = vadd.f32 0.0, %v935
    %v937 = vpop.f32.mrf.mxu0
    %938 = vdwg.mxu0
    %939 = vxpose.xlu0.b32.start [1/16] %v865, 128
    %940 = vxpose.xlu0.b32.cont [2/16] 0.0, 128
    %941 = vxpose.xlu0.b32.cont [3/16] 0.0, 128
    %942 = vxpose.xlu0.b32.cont [4/16] 0.0, 128
    %943 = vxpose.xlu0.b32.cont [5/16] 0.0, 128
    %944 = vxpose.xlu0.b32.cont [6/16] 0.0, 128
    %945 = vxpose.xlu0.b32.cont [7/16] 0.0, 128
    %946 = vxpose.xlu0.b32.cont [8/16] 0.0, 128
    %947 = vxpose.xlu0.b32.cont [9/16] 0.0, 128
    %948 = vxpose.xlu0.b32.cont [10/16] 0.0, 128
    %949 = vxpose.xlu0.b32.cont [11/16] 0.0, 128
    %950 = vxpose.xlu0.b32.cont [12/16] 0.0, 128
    %951 = vxpose.xlu0.b32.cont [13/16] 0.0, 128
    %952 = vxpose.xlu0.b32.cont [14/16] 0.0, 128
    %953 = vxpose.xlu0.b32.cont [15/16] 0.0, 128
    %954 = vxpose.xlu0.b32.end [16/16] 0.0, 128
    %v955 = vpop.trf.xlu0
    %v956 = vpop.trf.xlu0
    %v957 = vpop.trf.xlu0
    %v958 = vpop.trf.xlu0
    %v959 = vpop.trf.xlu0
    %v960 = vpop.trf.xlu0
    %v961 = vpop.trf.xlu0
    %v962 = vpop.trf.xlu0
    %v963 = vpop.trf.xlu0
    %v964 = vpop.trf.xlu0
    %v965 = vpop.trf.xlu0
    %v966 = vpop.trf.xlu0
    %v967 = vpop.trf.xlu0
    %v968 = vpop.trf.xlu0
    %v969 = vpop.trf.xlu0
    %v970 = vpop.trf.xlu0
    %v971 = vlaneseq
    %v972 = vshrl.u32 %v971, 7
    %v973 = vsub.s32 0, %v972
    %v974 = vrot.slane %v955, %v973
    %v975 = vadd.f32 %v865, %v974
    %v976 = vmul.f32 %v936, 2.0
    %v977 = vsub.f32 %v975, %v976
    %v978 = vmax.f32 %v977, 0.0
    %v979 = vadd.f32 %v978, 1e-12
    %v980 = vrsqrt.pop %v979
    %v981 = vmul.f32 %v979, %v980
    %vm982 = vcmp.eq.f32.partialorder %v979, inf
    %v983 = vsel %vm982, %v979, %v981
    %vm984 = vcmp.eq.f32.partialorder %v979, 0.0
    %v985 = vand.u32 %v979, 2147483648
    %v986 = vsel %vm984, %v985, %v983
    %v987 = vsub.f32 0.0, %v986
    %v988 = vmul.f32 %v987, 10.0
    %v990 = vcombine.high %v61, %v61
    %v992 = vunpack.c.l.s4 1966171168
    %v993 = vunpack.c.0.s8 %v992
    %v994 = vlaneseq
    %v995 = vshrl.u32 %v994, 7
    %v996 = vsub.s32 %v993, %v995
    %v997 = vrot.slane %v61, %v996
    %v999 = vunpack.c.l.s4 1966171168
    %v1000 = vunpack.c.0.s8 %v999
    %v1001 = vlaneseq
    %v1002 = vshrl.u32 %v1001, 7
    %v1003 = vsub.s32 %v1000, %v1002
    %v1004 = vrot.slane %v990, %v1003
    %v1005 = vcombine.high %v997, %v997
    %v1006 = vcombine.high %v1004, %v1004
    %v1008 = vunpack.c.l.s4 1966171168
    %v1009 = vunpack.c.0.s8 %v1008
    %v1010 = vlaneseq
    %v1011 = vshrl.u32 %v1010, 7
    %v1012 = vsub.s32 %v1009, %v1011
    %v1013 = vrot.slane %v997, %v1012
    %v1015 = vunpack.c.l.s4 1966171168
    %v1016 = vunpack.c.0.s8 %v1015
    %v1017 = vlaneseq
    %v1018 = vshrl.u32 %v1017, 7
    %v1019 = vsub.s32 %v1016, %v1018
    %v1020 = vrot.slane %v1004, %v1019
    %v1022 = vunpack.c.l.s4 1966171168
    %v1023 = vunpack.c.0.s8 %v1022
    %v1024 = vlaneseq
    %v1025 = vshrl.u32 %v1024, 7
    %v1026 = vsub.s32 %v1023, %v1025
    %v1027 = vrot.slane %v1005, %v1026
    %v1029 = vunpack.c.l.s4 1966171168
    %v1030 = vunpack.c.0.s8 %v1029
    %v1031 = vlaneseq
    %v1032 = vshrl.u32 %v1031, 7
    %v1033 = vsub.s32 %v1030, %v1032
    %v1034 = vrot.slane %v1006, %v1033
    %v1035 = vcombine.high %v1013, %v1013
    %v1036 = vcombine.high %v1020, %v1020
    %v1037 = vcombine.high %v1027, %v1027
    %v1038 = vcombine.high %v1034, %v1034
    %v1039 = vlaneseq
    %v1040 = vshrl.u32 %v1039, 7
    %v1041 = vsub.s32 0, %v1040
    %v1042 = vrot.slane %v1013, %v1041
    %v1043 = vlaneseq
    %v1044 = vshrl.u32 %v1043, 7
    %v1045 = vsub.s32 0, %v1044
    %v1046 = vrot.slane %v1027, %v1045
    %v1047 = vlaneseq
    %v1048 = vshrl.u32 %v1047, 7
    %v1049 = vsub.s32 0, %v1048
    %v1050 = vrot.slane %v1035, %v1049
    %v1051 = vlaneseq
    %v1052 = vshrl.u32 %v1051, 7
    %v1053 = vsub.s32 0, %v1052
    %v1054 = vrot.slane %v1037, %v1053
    %v1055 = vlaneseq
    %v1056 = vshrl.u32 %v1055, 7
    %v1057 = vsub.s32 0, %v1056
    %v1058 = vrot.slane %v1020, %v1057
    %v1059 = vlaneseq
    %v1060 = vshrl.u32 %v1059, 7
    %v1061 = vsub.s32 0, %v1060
    %v1062 = vrot.slane %v1034, %v1061
    %v1063 = vlaneseq
    %v1064 = vshrl.u32 %v1063, 7
    %v1065 = vsub.s32 0, %v1064
    %v1066 = vrot.slane %v1036, %v1065
    %v1067 = vlaneseq
    %v1068 = vshrl.u32 %v1067, 7
    %v1069 = vsub.s32 0, %v1068
    %v1070 = vrot.slane %v1038, %v1069
    %v1079 = vsub.f32 %v1042, %v61
    %v1080 = vsub.f32 %v1046, %v61
    %v1081 = vsub.f32 %v1050, %v61
    %v1082 = vsub.f32 %v1054, %v61
    %v1083 = vsub.f32 %v1058, %v61
    %v1084 = vsub.f32 %v1062, %v61
    %v1085 = vsub.f32 %v1066, %v61
    %v1086 = vsub.f32 %v1070, %v61
    %v1087 = vand.u32 2147483647, %v1079
    %v1088 = vand.u32 2147483647, %v1080
    %v1089 = vand.u32 2147483647, %v1081
    %v1090 = vand.u32 2147483647, %v1082
    %v1091 = vand.u32 2147483647, %v1083
    %v1092 = vand.u32 2147483647, %v1084
    %v1093 = vand.u32 2147483647, %v1085
    %v1094 = vand.u32 2147483647, %v1086
    %v1095 = vsel %vm67, %v1087, 0.0
    %1096 = vadd.xlane.f32.xlu0 %v1095
    %v1097 = vpop.xlane.xlu0 %1096
    %v1098 = vsel %vm67, %v1088, 0.0
    %1099 = vadd.xlane.f32.xlu0 %v1098
    %v1100 = vpop.xlane.xlu0 %1099
    %v1101 = vsel %vm67, %v1089, 0.0
    %1102 = vadd.xlane.f32.xlu0 %v1101
    %v1103 = vpop.xlane.xlu0 %1102
    %v1104 = vsel %vm67, %v1090, 0.0
    %1105 = vadd.xlane.f32.xlu0 %v1104
    %v1106 = vpop.xlane.xlu0 %1105
    %v1107 = vsel %vm67, %v1091, 0.0
    %1108 = vadd.xlane.f32.xlu0 %v1107
    %v1109 = vpop.xlane.xlu0 %1108
    %v1110 = vsel %vm67, %v1092, 0.0
    %1111 = vadd.xlane.f32.xlu0 %v1110
    %v1112 = vpop.xlane.xlu0 %1111
    %v1113 = vsel %vm67, %v1093, 0.0
    %1114 = vadd.xlane.f32.xlu0 %v1113
    %v1115 = vpop.xlane.xlu0 %1114
    %v1116 = vsel %vm67, %v1094, 0.0
    %1117 = vadd.xlane.f32.xlu0 %v1116
    %v1118 = vpop.xlane.xlu0 %1117
    %vm1119 = vcmp.ne.s32.totalorder %v570, %v89
    %v1120 = vsel %vm1119, %v988, -1e+30
    %vm1121 = vcmask 64512
    %v1122 = vsel %vm1121, %v1120, -inf
    %1123 = vmax.xlane.f32.xlu0 %v1122
    %v1124 = vpop.xlane.xlu0 %1123
    %v1125 = vsub.f32 %v988, %v1124
    %v1126 = vmul.f32 %v1125, 1.442695
    %v1127 = vpow.pop %v1126
    %v1128 = vsel %vm1119, %v1127, 0.0
    %v1137 = vlaneseq
    %v1138 = vshrl.u32 %v1137, 7
    %v1139 = vsub.s32 0, %v1138
    %v1140 = vrot.slane %v1097, %v1139
    %v1141 = vlaneseq
    %v1142 = vshrl.u32 %v1141, 7
    %v1143 = vsub.s32 1, %v1142
    %v1144 = vrot.slane %v1097, %v1143
    %v1145 = vlaneseq
    %v1146 = vshrl.u32 %v1145, 7
    %v1147 = vsub.s32 2, %v1146
    %v1148 = vrot.slane %v1097, %v1147
    %v1149 = vlaneseq
    %v1150 = vshrl.u32 %v1149, 7
    %v1151 = vsub.s32 3, %v1150
    %v1152 = vrot.slane %v1097, %v1151
    %v1153 = vlaneseq
    %v1154 = vshrl.u32 %v1153, 7
    %v1155 = vsub.s32 4, %v1154
    %v1156 = vrot.slane %v1097, %v1155
    %v1157 = vlaneseq
    %v1158 = vshrl.u32 %v1157, 7
    %v1159 = vsub.s32 5, %v1158
    %v1160 = vrot.slane %v1097, %v1159
    %v1161 = vlaneseq
    %v1162 = vshrl.u32 %v1161, 7
    %v1163 = vsub.s32 6, %v1162
    %v1164 = vrot.slane %v1097, %v1163
    %v1165 = vlaneseq
    %v1166 = vshrl.u32 %v1165, 7
    %v1167 = vsub.s32 7, %v1166
    %v1168 = vrot.slane %v1097, %v1167
    %v1169 = vlaneseq
    %v1170 = vshrl.u32 %v1169, 7
    %v1171 = vsub.s32 0, %v1170
    %v1172 = vrot.slane %v1100, %v1171
    %v1173 = vlaneseq
    %v1174 = vshrl.u32 %v1173, 7
    %v1175 = vsub.s32 1, %v1174
    %v1176 = vrot.slane %v1100, %v1175
    %v1177 = vlaneseq
    %v1178 = vshrl.u32 %v1177, 7
    %v1179 = vsub.s32 2, %v1178
    %v1180 = vrot.slane %v1100, %v1179
    %v1181 = vlaneseq
    %v1182 = vshrl.u32 %v1181, 7
    %v1183 = vsub.s32 3, %v1182
    %v1184 = vrot.slane %v1100, %v1183
    %v1185 = vlaneseq
    %v1186 = vshrl.u32 %v1185, 7
    %v1187 = vsub.s32 4, %v1186
    %v1188 = vrot.slane %v1100, %v1187
    %v1189 = vlaneseq
    %v1190 = vshrl.u32 %v1189, 7
    %v1191 = vsub.s32 5, %v1190
    %v1192 = vrot.slane %v1100, %v1191
    %v1193 = vlaneseq
    %v1194 = vshrl.u32 %v1193, 7
    %v1195 = vsub.s32 6, %v1194
    %v1196 = vrot.slane %v1100, %v1195
    %v1197 = vlaneseq
    %v1198 = vshrl.u32 %v1197, 7
    %v1199 = vsub.s32 7, %v1198
    %v1200 = vrot.slane %v1100, %v1199
    %v1201 = vlaneseq
    %v1202 = vshrl.u32 %v1201, 7
    %v1203 = vsub.s32 0, %v1202
    %v1204 = vrot.slane %v1103, %v1203
    %v1205 = vlaneseq
    %v1206 = vshrl.u32 %v1205, 7
    %v1207 = vsub.s32 1, %v1206
    %v1208 = vrot.slane %v1103, %v1207
    %v1209 = vlaneseq
    %v1210 = vshrl.u32 %v1209, 7
    %v1211 = vsub.s32 2, %v1210
    %v1212 = vrot.slane %v1103, %v1211
    %v1213 = vlaneseq
    %v1214 = vshrl.u32 %v1213, 7
    %v1215 = vsub.s32 3, %v1214
    %v1216 = vrot.slane %v1103, %v1215
    %v1217 = vlaneseq
    %v1218 = vshrl.u32 %v1217, 7
    %v1219 = vsub.s32 4, %v1218
    %v1220 = vrot.slane %v1103, %v1219
    %v1221 = vlaneseq
    %v1222 = vshrl.u32 %v1221, 7
    %v1223 = vsub.s32 5, %v1222
    %v1224 = vrot.slane %v1103, %v1223
    %v1225 = vlaneseq
    %v1226 = vshrl.u32 %v1225, 7
    %v1227 = vsub.s32 6, %v1226
    %v1228 = vrot.slane %v1103, %v1227
    %v1229 = vlaneseq
    %v1230 = vshrl.u32 %v1229, 7
    %v1231 = vsub.s32 7, %v1230
    %v1232 = vrot.slane %v1103, %v1231
    %v1233 = vlaneseq
    %v1234 = vshrl.u32 %v1233, 7
    %v1235 = vsub.s32 0, %v1234
    %v1236 = vrot.slane %v1106, %v1235
    %v1237 = vlaneseq
    %v1238 = vshrl.u32 %v1237, 7
    %v1239 = vsub.s32 1, %v1238
    %v1240 = vrot.slane %v1106, %v1239
    %v1241 = vlaneseq
    %v1242 = vshrl.u32 %v1241, 7
    %v1243 = vsub.s32 2, %v1242
    %v1244 = vrot.slane %v1106, %v1243
    %v1245 = vlaneseq
    %v1246 = vshrl.u32 %v1245, 7
    %v1247 = vsub.s32 3, %v1246
    %v1248 = vrot.slane %v1106, %v1247
    %v1249 = vlaneseq
    %v1250 = vshrl.u32 %v1249, 7
    %v1251 = vsub.s32 4, %v1250
    %v1252 = vrot.slane %v1106, %v1251
    %v1253 = vlaneseq
    %v1254 = vshrl.u32 %v1253, 7
    %v1255 = vsub.s32 5, %v1254
    %v1256 = vrot.slane %v1106, %v1255
    %v1257 = vlaneseq
    %v1258 = vshrl.u32 %v1257, 7
    %v1259 = vsub.s32 6, %v1258
    %v1260 = vrot.slane %v1106, %v1259
    %v1261 = vlaneseq
    %v1262 = vshrl.u32 %v1261, 7
    %v1263 = vsub.s32 7, %v1262
    %v1264 = vrot.slane %v1106, %v1263
    %v1265 = vlaneseq
    %v1266 = vshrl.u32 %v1265, 7
    %v1267 = vsub.s32 0, %v1266
    %v1268 = vrot.slane %v1109, %v1267
    %v1269 = vlaneseq
    %v1270 = vshrl.u32 %v1269, 7
    %v1271 = vsub.s32 1, %v1270
    %v1272 = vrot.slane %v1109, %v1271
    %v1273 = vlaneseq
    %v1274 = vshrl.u32 %v1273, 7
    %v1275 = vsub.s32 2, %v1274
    %v1276 = vrot.slane %v1109, %v1275
    %v1277 = vlaneseq
    %v1278 = vshrl.u32 %v1277, 7
    %v1279 = vsub.s32 3, %v1278
    %v1280 = vrot.slane %v1109, %v1279
    %v1281 = vlaneseq
    %v1282 = vshrl.u32 %v1281, 7
    %v1283 = vsub.s32 4, %v1282
    %v1284 = vrot.slane %v1109, %v1283
    %v1285 = vlaneseq
    %v1286 = vshrl.u32 %v1285, 7
    %v1287 = vsub.s32 5, %v1286
    %v1288 = vrot.slane %v1109, %v1287
    %v1289 = vlaneseq
    %v1290 = vshrl.u32 %v1289, 7
    %v1291 = vsub.s32 6, %v1290
    %v1292 = vrot.slane %v1109, %v1291
    %v1293 = vlaneseq
    %v1294 = vshrl.u32 %v1293, 7
    %v1295 = vsub.s32 7, %v1294
    %v1296 = vrot.slane %v1109, %v1295
    %v1297 = vlaneseq
    %v1298 = vshrl.u32 %v1297, 7
    %v1299 = vsub.s32 0, %v1298
    %v1300 = vrot.slane %v1112, %v1299
    %v1301 = vlaneseq
    %v1302 = vshrl.u32 %v1301, 7
    %v1303 = vsub.s32 1, %v1302
    %v1304 = vrot.slane %v1112, %v1303
    %v1305 = vlaneseq
    %v1306 = vshrl.u32 %v1305, 7
    %v1307 = vsub.s32 2, %v1306
    %v1308 = vrot.slane %v1112, %v1307
    %v1309 = vlaneseq
    %v1310 = vshrl.u32 %v1309, 7
    %v1311 = vsub.s32 3, %v1310
    %v1312 = vrot.slane %v1112, %v1311
    %v1313 = vlaneseq
    %v1314 = vshrl.u32 %v1313, 7
    %v1315 = vsub.s32 4, %v1314
    %v1316 = vrot.slane %v1112, %v1315
    %v1317 = vlaneseq
    %v1318 = vshrl.u32 %v1317, 7
    %v1319 = vsub.s32 5, %v1318
    %v1320 = vrot.slane %v1112, %v1319
    %v1321 = vlaneseq
    %v1322 = vshrl.u32 %v1321, 7
    %v1323 = vsub.s32 6, %v1322
    %v1324 = vrot.slane %v1112, %v1323
    %v1325 = vlaneseq
    %v1326 = vshrl.u32 %v1325, 7
    %v1327 = vsub.s32 7, %v1326
    %v1328 = vrot.slane %v1112, %v1327
    %v1329 = vlaneseq
    %v1330 = vshrl.u32 %v1329, 7
    %v1331 = vsub.s32 0, %v1330
    %v1332 = vrot.slane %v1115, %v1331
    %v1333 = vlaneseq
    %v1334 = vshrl.u32 %v1333, 7
    %v1335 = vsub.s32 1, %v1334
    %v1336 = vrot.slane %v1115, %v1335
    %v1337 = vlaneseq
    %v1338 = vshrl.u32 %v1337, 7
    %v1339 = vsub.s32 2, %v1338
    %v1340 = vrot.slane %v1115, %v1339
    %v1341 = vlaneseq
    %v1342 = vshrl.u32 %v1341, 7
    %v1343 = vsub.s32 3, %v1342
    %v1344 = vrot.slane %v1115, %v1343
    %v1345 = vlaneseq
    %v1346 = vshrl.u32 %v1345, 7
    %v1347 = vsub.s32 4, %v1346
    %v1348 = vrot.slane %v1115, %v1347
    %v1349 = vlaneseq
    %v1350 = vshrl.u32 %v1349, 7
    %v1351 = vsub.s32 5, %v1350
    %v1352 = vrot.slane %v1115, %v1351
    %v1353 = vlaneseq
    %v1354 = vshrl.u32 %v1353, 7
    %v1355 = vsub.s32 6, %v1354
    %v1356 = vrot.slane %v1115, %v1355
    %v1357 = vlaneseq
    %v1358 = vshrl.u32 %v1357, 7
    %v1359 = vsub.s32 7, %v1358
    %v1360 = vrot.slane %v1115, %v1359
    %v1361 = vlaneseq
    %v1362 = vshrl.u32 %v1361, 7
    %v1363 = vsub.s32 0, %v1362
    %v1364 = vrot.slane %v1118, %v1363
    %v1365 = vlaneseq
    %v1366 = vshrl.u32 %v1365, 7
    %v1367 = vsub.s32 1, %v1366
    %v1368 = vrot.slane %v1118, %v1367
    %v1369 = vlaneseq
    %v1370 = vshrl.u32 %v1369, 7
    %v1371 = vsub.s32 2, %v1370
    %v1372 = vrot.slane %v1118, %v1371
    %v1373 = vlaneseq
    %v1374 = vshrl.u32 %v1373, 7
    %v1375 = vsub.s32 3, %v1374
    %v1376 = vrot.slane %v1118, %v1375
    %v1377 = vlaneseq
    %v1378 = vshrl.u32 %v1377, 7
    %v1379 = vsub.s32 4, %v1378
    %v1380 = vrot.slane %v1118, %v1379
    %v1381 = vlaneseq
    %v1382 = vshrl.u32 %v1381, 7
    %v1383 = vsub.s32 5, %v1382
    %v1384 = vrot.slane %v1118, %v1383
    %v1385 = vlaneseq
    %v1386 = vshrl.u32 %v1385, 7
    %v1387 = vsub.s32 6, %v1386
    %v1388 = vrot.slane %v1118, %v1387
    %v1389 = vlaneseq
    %v1390 = vshrl.u32 %v1389, 7
    %v1391 = vsub.s32 7, %v1390
    %v1392 = vrot.slane %v1118, %v1391
    %vm1457 = vcmp.ge.f32.partialorder %v1097, %v1140
    %vm1458 = vcmp.ge.f32.partialorder %v1097, %v1144
    %vm1459 = vcmp.ge.f32.partialorder %v1097, %v1148
    %vm1460 = vcmp.ge.f32.partialorder %v1097, %v1152
    %vm1461 = vcmp.ge.f32.partialorder %v1097, %v1156
    %vm1462 = vcmp.ge.f32.partialorder %v1097, %v1160
    %vm1463 = vcmp.ge.f32.partialorder %v1097, %v1164
    %vm1464 = vcmp.ge.f32.partialorder %v1097, %v1168
    %vm1465 = vcmp.ge.f32.partialorder %v1100, %v1172
    %vm1466 = vcmp.ge.f32.partialorder %v1100, %v1176
    %vm1467 = vcmp.ge.f32.partialorder %v1100, %v1180
    %vm1468 = vcmp.ge.f32.partialorder %v1100, %v1184
    %vm1469 = vcmp.ge.f32.partialorder %v1100, %v1188
    %vm1470 = vcmp.ge.f32.partialorder %v1100, %v1192
    %vm1471 = vcmp.ge.f32.partialorder %v1100, %v1196
    %vm1472 = vcmp.ge.f32.partialorder %v1100, %v1200
    %vm1473 = vcmp.ge.f32.partialorder %v1103, %v1204
    %vm1474 = vcmp.ge.f32.partialorder %v1103, %v1208
    %vm1475 = vcmp.ge.f32.partialorder %v1103, %v1212
    %vm1476 = vcmp.ge.f32.partialorder %v1103, %v1216
    %vm1477 = vcmp.ge.f32.partialorder %v1103, %v1220
    %vm1478 = vcmp.ge.f32.partialorder %v1103, %v1224
    %vm1479 = vcmp.ge.f32.partialorder %v1103, %v1228
    %vm1480 = vcmp.ge.f32.partialorder %v1103, %v1232
    %vm1481 = vcmp.ge.f32.partialorder %v1106, %v1236
    %vm1482 = vcmp.ge.f32.partialorder %v1106, %v1240
    %vm1483 = vcmp.ge.f32.partialorder %v1106, %v1244
    %vm1484 = vcmp.ge.f32.partialorder %v1106, %v1248
    %vm1485 = vcmp.ge.f32.partialorder %v1106, %v1252
    %vm1486 = vcmp.ge.f32.partialorder %v1106, %v1256
    %vm1487 = vcmp.ge.f32.partialorder %v1106, %v1260
    %vm1488 = vcmp.ge.f32.partialorder %v1106, %v1264
    %vm1489 = vcmp.ge.f32.partialorder %v1109, %v1268
    %vm1490 = vcmp.ge.f32.partialorder %v1109, %v1272
    %vm1491 = vcmp.ge.f32.partialorder %v1109, %v1276
    %vm1492 = vcmp.ge.f32.partialorder %v1109, %v1280
    %vm1493 = vcmp.ge.f32.partialorder %v1109, %v1284
    %vm1494 = vcmp.ge.f32.partialorder %v1109, %v1288
    %vm1495 = vcmp.ge.f32.partialorder %v1109, %v1292
    %vm1496 = vcmp.ge.f32.partialorder %v1109, %v1296
    %vm1497 = vcmp.ge.f32.partialorder %v1112, %v1300
    %vm1498 = vcmp.ge.f32.partialorder %v1112, %v1304
    %vm1499 = vcmp.ge.f32.partialorder %v1112, %v1308
    %vm1500 = vcmp.ge.f32.partialorder %v1112, %v1312
    %vm1501 = vcmp.ge.f32.partialorder %v1112, %v1316
    %vm1502 = vcmp.ge.f32.partialorder %v1112, %v1320
    %vm1503 = vcmp.ge.f32.partialorder %v1112, %v1324
    %vm1504 = vcmp.ge.f32.partialorder %v1112, %v1328
    %vm1505 = vcmp.ge.f32.partialorder %v1115, %v1332
    %vm1506 = vcmp.ge.f32.partialorder %v1115, %v1336
    %vm1507 = vcmp.ge.f32.partialorder %v1115, %v1340
    %vm1508 = vcmp.ge.f32.partialorder %v1115, %v1344
    %vm1509 = vcmp.ge.f32.partialorder %v1115, %v1348
    %vm1510 = vcmp.ge.f32.partialorder %v1115, %v1352
    %vm1511 = vcmp.ge.f32.partialorder %v1115, %v1356
    %vm1512 = vcmp.ge.f32.partialorder %v1115, %v1360
    %vm1513 = vcmp.ge.f32.partialorder %v1118, %v1364
    %vm1514 = vcmp.ge.f32.partialorder %v1118, %v1368
    %vm1515 = vcmp.ge.f32.partialorder %v1118, %v1372
    %vm1516 = vcmp.ge.f32.partialorder %v1118, %v1376
    %vm1517 = vcmp.ge.f32.partialorder %v1118, %v1380
    %vm1518 = vcmp.ge.f32.partialorder %v1118, %v1384
    %vm1519 = vcmp.ge.f32.partialorder %v1118, %v1388
    %vm1520 = vcmp.ge.f32.partialorder %v1118, %v1392
    %v1521 = vsel %vm1457, 1, 0
    %v1522 = vsel %vm1458, 1, 0
    %v1523 = vsel %vm1459, 1, 0
    %v1524 = vsel %vm1460, 1, 0
    %v1525 = vsel %vm1461, 1, 0
    %v1526 = vsel %vm1462, 1, 0
    %v1527 = vsel %vm1463, 1, 0
    %v1528 = vsel %vm1464, 1, 0
    %v1529 = vsel %vm1465, 1, 0
    %v1530 = vsel %vm1466, 1, 0
    %v1531 = vsel %vm1467, 1, 0
    %v1532 = vsel %vm1468, 1, 0
    %v1533 = vsel %vm1469, 1, 0
    %v1534 = vsel %vm1470, 1, 0
    %v1535 = vsel %vm1471, 1, 0
    %v1536 = vsel %vm1472, 1, 0
    %v1537 = vsel %vm1473, 1, 0
    %v1538 = vsel %vm1474, 1, 0
    %v1539 = vsel %vm1475, 1, 0
    %v1540 = vsel %vm1476, 1, 0
    %v1541 = vsel %vm1477, 1, 0
    %v1542 = vsel %vm1478, 1, 0
    %v1543 = vsel %vm1479, 1, 0
    %v1544 = vsel %vm1480, 1, 0
    %v1545 = vsel %vm1481, 1, 0
    %v1546 = vsel %vm1482, 1, 0
    %v1547 = vsel %vm1483, 1, 0
    %v1548 = vsel %vm1484, 1, 0
    %v1549 = vsel %vm1485, 1, 0
    %v1550 = vsel %vm1486, 1, 0
    %v1551 = vsel %vm1487, 1, 0
    %v1552 = vsel %vm1488, 1, 0
    %v1553 = vsel %vm1489, 1, 0
    %v1554 = vsel %vm1490, 1, 0
    %v1555 = vsel %vm1491, 1, 0
    %v1556 = vsel %vm1492, 1, 0
    %v1557 = vsel %vm1493, 1, 0
    %v1558 = vsel %vm1494, 1, 0
    %v1559 = vsel %vm1495, 1, 0
    %v1560 = vsel %vm1496, 1, 0
    %v1561 = vsel %vm1497, 1, 0
    %v1562 = vsel %vm1498, 1, 0
    %v1563 = vsel %vm1499, 1, 0
    %v1564 = vsel %vm1500, 1, 0
    %v1565 = vsel %vm1501, 1, 0
    %v1566 = vsel %vm1502, 1, 0
    %v1567 = vsel %vm1503, 1, 0
    %v1568 = vsel %vm1504, 1, 0
    %v1569 = vsel %vm1505, 1, 0
    %v1570 = vsel %vm1506, 1, 0
    %v1571 = vsel %vm1507, 1, 0
    %v1572 = vsel %vm1508, 1, 0
    %v1573 = vsel %vm1509, 1, 0
    %v1574 = vsel %vm1510, 1, 0
    %v1575 = vsel %vm1511, 1, 0
    %v1576 = vsel %vm1512, 1, 0
    %v1577 = vsel %vm1513, 1, 0
    %v1578 = vsel %vm1514, 1, 0
    %v1579 = vsel %vm1515, 1, 0
    %v1580 = vsel %vm1516, 1, 0
    %v1581 = vsel %vm1517, 1, 0
    %v1582 = vsel %vm1518, 1, 0
    %v1583 = vsel %vm1519, 1, 0
    %v1584 = vsel %vm1520, 1, 0
    %v1585 = vcvt.s32.f32 %v1521
    %v1586 = vcvt.s32.f32 %v1522
    %v1587 = vcvt.s32.f32 %v1523
    %v1588 = vcvt.s32.f32 %v1524
    %v1589 = vcvt.s32.f32 %v1525
    %v1590 = vcvt.s32.f32 %v1526
    %v1591 = vcvt.s32.f32 %v1527
    %v1592 = vcvt.s32.f32 %v1528
    %v1593 = vcvt.s32.f32 %v1529
    %v1594 = vcvt.s32.f32 %v1530
    %v1595 = vcvt.s32.f32 %v1531
    %v1596 = vcvt.s32.f32 %v1532
    %v1597 = vcvt.s32.f32 %v1533
    %v1598 = vcvt.s32.f32 %v1534
    %v1599 = vcvt.s32.f32 %v1535
    %v1600 = vcvt.s32.f32 %v1536
    %v1601 = vcvt.s32.f32 %v1537
    %v1602 = vcvt.s32.f32 %v1538
    %v1603 = vcvt.s32.f32 %v1539
    %v1604 = vcvt.s32.f32 %v1540
    %v1605 = vcvt.s32.f32 %v1541
    %v1606 = vcvt.s32.f32 %v1542
    %v1607 = vcvt.s32.f32 %v1543
    %v1608 = vcvt.s32.f32 %v1544
    %v1609 = vcvt.s32.f32 %v1545
    %v1610 = vcvt.s32.f32 %v1546
    %v1611 = vcvt.s32.f32 %v1547
    %v1612 = vcvt.s32.f32 %v1548
    %v1613 = vcvt.s32.f32 %v1549
    %v1614 = vcvt.s32.f32 %v1550
    %v1615 = vcvt.s32.f32 %v1551
    %v1616 = vcvt.s32.f32 %v1552
    %v1617 = vcvt.s32.f32 %v1553
    %v1618 = vcvt.s32.f32 %v1554
    %v1619 = vcvt.s32.f32 %v1555
    %v1620 = vcvt.s32.f32 %v1556
    %v1621 = vcvt.s32.f32 %v1557
    %v1622 = vcvt.s32.f32 %v1558
    %v1623 = vcvt.s32.f32 %v1559
    %v1624 = vcvt.s32.f32 %v1560
    %v1625 = vcvt.s32.f32 %v1561
    %v1626 = vcvt.s32.f32 %v1562
    %v1627 = vcvt.s32.f32 %v1563
    %v1628 = vcvt.s32.f32 %v1564
    %v1629 = vcvt.s32.f32 %v1565
    %v1630 = vcvt.s32.f32 %v1566
    %v1631 = vcvt.s32.f32 %v1567
    %v1632 = vcvt.s32.f32 %v1568
    %v1633 = vcvt.s32.f32 %v1569
    %v1634 = vcvt.s32.f32 %v1570
    %v1635 = vcvt.s32.f32 %v1571
    %v1636 = vcvt.s32.f32 %v1572
    %v1637 = vcvt.s32.f32 %v1573
    %v1638 = vcvt.s32.f32 %v1574
    %v1639 = vcvt.s32.f32 %v1575
    %v1640 = vcvt.s32.f32 %v1576
    %v1641 = vcvt.s32.f32 %v1577
    %v1642 = vcvt.s32.f32 %v1578
    %v1643 = vcvt.s32.f32 %v1579
    %v1644 = vcvt.s32.f32 %v1580
    %v1645 = vcvt.s32.f32 %v1581
    %v1646 = vcvt.s32.f32 %v1582
    %v1647 = vcvt.s32.f32 %v1583
    %v1648 = vcvt.s32.f32 %v1584
    %v1650 = vcombine.high %v1128, %v1128
    %v1652 = vunpack.c.l.s4 1966171168
    %v1653 = vunpack.c.0.s8 %v1652
    %v1654 = vlaneseq
    %v1655 = vshrl.u32 %v1654, 7
    %v1656 = vsub.s32 %v1653, %v1655
    %v1657 = vrot.slane %v1128, %v1656
    %v1659 = vunpack.c.l.s4 1966171168
    %v1660 = vunpack.c.0.s8 %v1659
    %v1661 = vlaneseq
    %v1662 = vshrl.u32 %v1661, 7
    %v1663 = vsub.s32 %v1660, %v1662
    %v1664 = vrot.slane %v1650, %v1663
    %v1665 = vcombine.high %v1657, %v1657
    %v1666 = vcombine.high %v1664, %v1664
    %v1668 = vunpack.c.l.s4 1966171168
    %v1669 = vunpack.c.0.s8 %v1668
    %v1670 = vlaneseq
    %v1671 = vshrl.u32 %v1670, 7
    %v1672 = vsub.s32 %v1669, %v1671
    %v1673 = vrot.slane %v1657, %v1672
    %v1675 = vunpack.c.l.s4 1966171168
    %v1676 = vunpack.c.0.s8 %v1675
    %v1677 = vlaneseq
    %v1678 = vshrl.u32 %v1677, 7
    %v1679 = vsub.s32 %v1676, %v1678
    %v1680 = vrot.slane %v1664, %v1679
    %v1682 = vunpack.c.l.s4 1966171168
    %v1683 = vunpack.c.0.s8 %v1682
    %v1684 = vlaneseq
    %v1685 = vshrl.u32 %v1684, 7
    %v1686 = vsub.s32 %v1683, %v1685
    %v1687 = vrot.slane %v1665, %v1686
    %v1689 = vunpack.c.l.s4 1966171168
    %v1690 = vunpack.c.0.s8 %v1689
    %v1691 = vlaneseq
    %v1692 = vshrl.u32 %v1691, 7
    %v1693 = vsub.s32 %v1690, %v1692
    %v1694 = vrot.slane %v1666, %v1693
    %v1695 = vcombine.high %v1673, %v1673
    %v1696 = vcombine.high %v1680, %v1680
    %v1697 = vcombine.high %v1687, %v1687
    %v1698 = vcombine.high %v1694, %v1694
    %v1699 = vlaneseq
    %v1700 = vshrl.u32 %v1699, 7
    %v1701 = vsub.s32 0, %v1700
    %v1702 = vrot.slane %v1673, %v1701
    %v1703 = vlaneseq
    %v1704 = vshrl.u32 %v1703, 7
    %v1705 = vsub.s32 0, %v1704
    %v1706 = vrot.slane %v1687, %v1705
    %v1707 = vlaneseq
    %v1708 = vshrl.u32 %v1707, 7
    %v1709 = vsub.s32 0, %v1708
    %v1710 = vrot.slane %v1695, %v1709
    %v1711 = vlaneseq
    %v1712 = vshrl.u32 %v1711, 7
    %v1713 = vsub.s32 0, %v1712
    %v1714 = vrot.slane %v1697, %v1713
    %v1715 = vlaneseq
    %v1716 = vshrl.u32 %v1715, 7
    %v1717 = vsub.s32 0, %v1716
    %v1718 = vrot.slane %v1680, %v1717
    %v1719 = vlaneseq
    %v1720 = vshrl.u32 %v1719, 7
    %v1721 = vsub.s32 0, %v1720
    %v1722 = vrot.slane %v1694, %v1721
    %v1723 = vlaneseq
    %v1724 = vshrl.u32 %v1723, 7
    %v1725 = vsub.s32 0, %v1724
    %v1726 = vrot.slane %v1696, %v1725
    %v1727 = vlaneseq
    %v1728 = vshrl.u32 %v1727, 7
    %v1729 = vsub.s32 0, %v1728
    %v1730 = vrot.slane %v1698, %v1729
    %1732 = vbcast.lane.b32.xlu0 %v1702, 256
    %v1733 = vpop.permute.xlu0 %1732
    %1735 = vbcast.lane.b32.xlu0 %v1706, 256
    %v1736 = vpop.permute.xlu0 %1735
    %1738 = vbcast.lane.b32.xlu0 %v1710, 256
    %v1739 = vpop.permute.xlu0 %1738
    %1741 = vbcast.lane.b32.xlu0 %v1714, 256
    %v1742 = vpop.permute.xlu0 %1741
    %1744 = vbcast.lane.b32.xlu0 %v1718, 256
    %v1745 = vpop.permute.xlu0 %1744
    %1747 = vbcast.lane.b32.xlu0 %v1722, 256
    %v1748 = vpop.permute.xlu0 %1747
    %1750 = vbcast.lane.b32.xlu0 %v1726, 256
    %v1751 = vpop.permute.xlu0 %1750
    %1753 = vbcast.lane.b32.xlu0 %v1730, 256
    %v1754 = vpop.permute.xlu0 %1753
    %v1763 = vmul.f32 %v1585, %v1733
    %v1764 = vmul.f32 %v1586, %v1733
    %v1765 = vmul.f32 %v1587, %v1733
    %v1766 = vmul.f32 %v1588, %v1733
    %v1767 = vmul.f32 %v1589, %v1733
    %v1768 = vmul.f32 %v1590, %v1733
    %v1769 = vmul.f32 %v1591, %v1733
    %v1770 = vmul.f32 %v1592, %v1733
    %v1771 = vmul.f32 %v1593, %v1736
    %v1772 = vmul.f32 %v1594, %v1736
    %v1773 = vmul.f32 %v1595, %v1736
    %v1774 = vmul.f32 %v1596, %v1736
    %v1775 = vmul.f32 %v1597, %v1736
    %v1776 = vmul.f32 %v1598, %v1736
    %v1777 = vmul.f32 %v1599, %v1736
    %v1778 = vmul.f32 %v1600, %v1736
    %v1779 = vmul.f32 %v1601, %v1739
    %v1780 = vmul.f32 %v1602, %v1739
    %v1781 = vmul.f32 %v1603, %v1739
    %v1782 = vmul.f32 %v1604, %v1739
    %v1783 = vmul.f32 %v1605, %v1739
    %v1784 = vmul.f32 %v1606, %v1739
    %v1785 = vmul.f32 %v1607, %v1739
    %v1786 = vmul.f32 %v1608, %v1739
    %v1787 = vmul.f32 %v1609, %v1742
    %v1788 = vmul.f32 %v1610, %v1742
    %v1789 = vmul.f32 %v1611, %v1742
    %v1790 = vmul.f32 %v1612, %v1742
    %v1791 = vmul.f32 %v1613, %v1742
    %v1792 = vmul.f32 %v1614, %v1742
    %v1793 = vmul.f32 %v1615, %v1742
    %v1794 = vmul.f32 %v1616, %v1742
    %v1795 = vmul.f32 %v1617, %v1745
    %v1796 = vmul.f32 %v1618, %v1745
    %v1797 = vmul.f32 %v1619, %v1745
    %v1798 = vmul.f32 %v1620, %v1745
    %v1799 = vmul.f32 %v1621, %v1745
    %v1800 = vmul.f32 %v1622, %v1745
    %v1801 = vmul.f32 %v1623, %v1745
    %v1802 = vmul.f32 %v1624, %v1745
    %v1803 = vmul.f32 %v1625, %v1748
    %v1804 = vmul.f32 %v1626, %v1748
    %v1805 = vmul.f32 %v1627, %v1748
    %v1806 = vmul.f32 %v1628, %v1748
    %v1807 = vmul.f32 %v1629, %v1748
    %v1808 = vmul.f32 %v1630, %v1748
    %v1809 = vmul.f32 %v1631, %v1748
    %v1810 = vmul.f32 %v1632, %v1748
    %v1811 = vmul.f32 %v1633, %v1751
    %v1812 = vmul.f32 %v1634, %v1751
    %v1813 = vmul.f32 %v1635, %v1751
    %v1814 = vmul.f32 %v1636, %v1751
    %v1815 = vmul.f32 %v1637, %v1751
    %v1816 = vmul.f32 %v1638, %v1751
    %v1817 = vmul.f32 %v1639, %v1751
    %v1818 = vmul.f32 %v1640, %v1751
    %v1819 = vmul.f32 %v1641, %v1754
    %v1820 = vmul.f32 %v1642, %v1754
    %v1821 = vmul.f32 %v1643, %v1754
    %v1822 = vmul.f32 %v1644, %v1754
    %v1823 = vmul.f32 %v1645, %v1754
    %v1824 = vmul.f32 %v1646, %v1754
    %v1825 = vmul.f32 %v1647, %v1754
    %v1826 = vmul.f32 %v1648, %v1754
    %1891 = vset.pattern.permute.xlu0 0
    %1892 = vperm.xlu0 %1891, %v1763
    %v1893 = vpop.permute.xlu0 %1892
    %1894 = vset.pattern.permute.xlu0 0
    %1895 = vperm.xlu0 %1894, %v1764
    %v1896 = vpop.permute.xlu0 %1895
    %1897 = vset.pattern.permute.xlu0 0
    %1898 = vperm.xlu0 %1897, %v1765
    %v1899 = vpop.permute.xlu0 %1898
    %1900 = vset.pattern.permute.xlu0 0
    %1901 = vperm.xlu0 %1900, %v1766
    %v1902 = vpop.permute.xlu0 %1901
    %1903 = vset.pattern.permute.xlu0 0
    %1904 = vperm.xlu0 %1903, %v1767
    %v1905 = vpop.permute.xlu0 %1904
    %1906 = vset.pattern.permute.xlu0 0
    %1907 = vperm.xlu0 %1906, %v1768
    %v1908 = vpop.permute.xlu0 %1907
    %1909 = vset.pattern.permute.xlu0 0
    %1910 = vperm.xlu0 %1909, %v1769
    %v1911 = vpop.permute.xlu0 %1910
    %1912 = vset.pattern.permute.xlu0 0
    %1913 = vperm.xlu0 %1912, %v1770
    %v1914 = vpop.permute.xlu0 %1913
    %1915 = vset.pattern.permute.xlu0 0
    %1916 = vperm.xlu0 %1915, %v1771
    %v1917 = vpop.permute.xlu0 %1916
    %1918 = vset.pattern.permute.xlu0 0
    %1919 = vperm.xlu0 %1918, %v1772
    %v1920 = vpop.permute.xlu0 %1919
    %1921 = vset.pattern.permute.xlu0 0
    %1922 = vperm.xlu0 %1921, %v1773
    %v1923 = vpop.permute.xlu0 %1922
    %1924 = vset.pattern.permute.xlu0 0
    %1925 = vperm.xlu0 %1924, %v1774
    %v1926 = vpop.permute.xlu0 %1925
    %1927 = vset.pattern.permute.xlu0 0
    %1928 = vperm.xlu0 %1927, %v1775
    %v1929 = vpop.permute.xlu0 %1928
    %1930 = vset.pattern.permute.xlu0 0
    %1931 = vperm.xlu0 %1930, %v1776
    %v1932 = vpop.permute.xlu0 %1931
    %1933 = vset.pattern.permute.xlu0 0
    %1934 = vperm.xlu0 %1933, %v1777
    %v1935 = vpop.permute.xlu0 %1934
    %1936 = vset.pattern.permute.xlu0 0
    %1937 = vperm.xlu0 %1936, %v1778
    %v1938 = vpop.permute.xlu0 %1937
    %1939 = vset.pattern.permute.xlu0 0
    %1940 = vperm.xlu0 %1939, %v1779
    %v1941 = vpop.permute.xlu0 %1940
    %1942 = vset.pattern.permute.xlu0 0
    %1943 = vperm.xlu0 %1942, %v1780
    %v1944 = vpop.permute.xlu0 %1943
    %1945 = vset.pattern.permute.xlu0 0
    %1946 = vperm.xlu0 %1945, %v1781
    %v1947 = vpop.permute.xlu0 %1946
    %1948 = vset.pattern.permute.xlu0 0
    %1949 = vperm.xlu0 %1948, %v1782
    %v1950 = vpop.permute.xlu0 %1949
    %1951 = vset.pattern.permute.xlu0 0
    %1952 = vperm.xlu0 %1951, %v1783
    %v1953 = vpop.permute.xlu0 %1952
    %1954 = vset.pattern.permute.xlu0 0
    %1955 = vperm.xlu0 %1954, %v1784
    %v1956 = vpop.permute.xlu0 %1955
    %1957 = vset.pattern.permute.xlu0 0
    %1958 = vperm.xlu0 %1957, %v1785
    %v1959 = vpop.permute.xlu0 %1958
    %1960 = vset.pattern.permute.xlu0 0
    %1961 = vperm.xlu0 %1960, %v1786
    %v1962 = vpop.permute.xlu0 %1961
    %1963 = vset.pattern.permute.xlu0 0
    %1964 = vperm.xlu0 %1963, %v1787
    %v1965 = vpop.permute.xlu0 %1964
    %1966 = vset.pattern.permute.xlu0 0
    %1967 = vperm.xlu0 %1966, %v1788
    %v1968 = vpop.permute.xlu0 %1967
    %1969 = vset.pattern.permute.xlu0 0
    %1970 = vperm.xlu0 %1969, %v1789
    %v1971 = vpop.permute.xlu0 %1970
    %1972 = vset.pattern.permute.xlu0 0
    %1973 = vperm.xlu0 %1972, %v1790
    %v1974 = vpop.permute.xlu0 %1973
    %1975 = vset.pattern.permute.xlu0 0
    %1976 = vperm.xlu0 %1975, %v1791
    %v1977 = vpop.permute.xlu0 %1976
    %1978 = vset.pattern.permute.xlu0 0
    %1979 = vperm.xlu0 %1978, %v1792
    %v1980 = vpop.permute.xlu0 %1979
    %1981 = vset.pattern.permute.xlu0 0
    %1982 = vperm.xlu0 %1981, %v1793
    %v1983 = vpop.permute.xlu0 %1982
    %1984 = vset.pattern.permute.xlu0 0
    %1985 = vperm.xlu0 %1984, %v1794
    %v1986 = vpop.permute.xlu0 %1985
    %1987 = vset.pattern.permute.xlu0 0
    %1988 = vperm.xlu0 %1987, %v1795
    %v1989 = vpop.permute.xlu0 %1988
    %1990 = vset.pattern.permute.xlu0 0
    %1991 = vperm.xlu0 %1990, %v1796
    %v1992 = vpop.permute.xlu0 %1991
    %1993 = vset.pattern.permute.xlu0 0
    %1994 = vperm.xlu0 %1993, %v1797
    %v1995 = vpop.permute.xlu0 %1994
    %1996 = vset.pattern.permute.xlu0 0
    %1997 = vperm.xlu0 %1996, %v1798
    %v1998 = vpop.permute.xlu0 %1997
    %1999 = vset.pattern.permute.xlu0 0
    %2000 = vperm.xlu0 %1999, %v1799
    %v2001 = vpop.permute.xlu0 %2000
    %2002 = vset.pattern.permute.xlu0 0
    %2003 = vperm.xlu0 %2002, %v1800
    %v2004 = vpop.permute.xlu0 %2003
    %2005 = vset.pattern.permute.xlu0 0
    %2006 = vperm.xlu0 %2005, %v1801
    %v2007 = vpop.permute.xlu0 %2006
    %2008 = vset.pattern.permute.xlu0 0
    %2009 = vperm.xlu0 %2008, %v1802
    %v2010 = vpop.permute.xlu0 %2009
    %2011 = vset.pattern.permute.xlu0 0
    %2012 = vperm.xlu0 %2011, %v1803
    %v2013 = vpop.permute.xlu0 %2012
    %2014 = vset.pattern.permute.xlu0 0
    %2015 = vperm.xlu0 %2014, %v1804
    %v2016 = vpop.permute.xlu0 %2015
    %2017 = vset.pattern.permute.xlu0 0
    %2018 = vperm.xlu0 %2017, %v1805
    %v2019 = vpop.permute.xlu0 %2018
    %2020 = vset.pattern.permute.xlu0 0
    %2021 = vperm.xlu0 %2020, %v1806
    %v2022 = vpop.permute.xlu0 %2021
    %2023 = vset.pattern.permute.xlu0 0
    %2024 = vperm.xlu0 %2023, %v1807
    %v2025 = vpop.permute.xlu0 %2024
    %2026 = vset.pattern.permute.xlu0 0
    %2027 = vperm.xlu0 %2026, %v1808
    %v2028 = vpop.permute.xlu0 %2027
    %2029 = vset.pattern.permute.xlu0 0
    %2030 = vperm.xlu0 %2029, %v1809
    %v2031 = vpop.permute.xlu0 %2030
    %2032 = vset.pattern.permute.xlu0 0
    %2033 = vperm.xlu0 %2032, %v1810
    %v2034 = vpop.permute.xlu0 %2033
    %2035 = vset.pattern.permute.xlu0 0
    %2036 = vperm.xlu0 %2035, %v1811
    %v2037 = vpop.permute.xlu0 %2036
    %2038 = vset.pattern.permute.xlu0 0
    %2039 = vperm.xlu0 %2038, %v1812
    %v2040 = vpop.permute.xlu0 %2039
    %2041 = vset.pattern.permute.xlu0 0
    %2042 = vperm.xlu0 %2041, %v1813
    %v2043 = vpop.permute.xlu0 %2042
    %2044 = vset.pattern.permute.xlu0 0
    %2045 = vperm.xlu0 %2044, %v1814
    %v2046 = vpop.permute.xlu0 %2045
    %2047 = vset.pattern.permute.xlu0 0
    %2048 = vperm.xlu0 %2047, %v1815
    %v2049 = vpop.permute.xlu0 %2048
    %2050 = vset.pattern.permute.xlu0 0
    %2051 = vperm.xlu0 %2050, %v1816
    %v2052 = vpop.permute.xlu0 %2051
    %2053 = vset.pattern.permute.xlu0 0
    %2054 = vperm.xlu0 %2053, %v1817
    %v2055 = vpop.permute.xlu0 %2054
    %2056 = vset.pattern.permute.xlu0 0
    %2057 = vperm.xlu0 %2056, %v1818
    %v2058 = vpop.permute.xlu0 %2057
    %2059 = vset.pattern.permute.xlu0 0
    %2060 = vperm.xlu0 %2059, %v1819
    %v2061 = vpop.permute.xlu0 %2060
    %2062 = vset.pattern.permute.xlu0 0
    %2063 = vperm.xlu0 %2062, %v1820
    %v2064 = vpop.permute.xlu0 %2063
    %2065 = vset.pattern.permute.xlu0 0
    %2066 = vperm.xlu0 %2065, %v1821
    %v2067 = vpop.permute.xlu0 %2066
    %2068 = vset.pattern.permute.xlu0 0
    %2069 = vperm.xlu0 %2068, %v1822
    %v2070 = vpop.permute.xlu0 %2069
    %2071 = vset.pattern.permute.xlu0 0
    %2072 = vperm.xlu0 %2071, %v1823
    %v2073 = vpop.permute.xlu0 %2072
    %2074 = vset.pattern.permute.xlu0 0
    %2075 = vperm.xlu0 %2074, %v1824
    %v2076 = vpop.permute.xlu0 %2075
    %2077 = vset.pattern.permute.xlu0 0
    %2078 = vperm.xlu0 %2077, %v1825
    %v2079 = vpop.permute.xlu0 %2078
    %2080 = vset.pattern.permute.xlu0 0
    %2081 = vperm.xlu0 %2080, %v1826
    %v2082 = vpop.permute.xlu0 %2081
    %v2083 = vlaneseq
    %v2084 = vshrl.u32 %v2083, 7
    %v2085 = vsub.s32 %v89, %v2084
    %v2086 = vrot.slane %v1893, %v2085
    %v2087 = vlaneseq
    %v2088 = vshrl.u32 %v2087, 7
    %v2089 = vsub.s32 %v89, %v2088
    %v2090 = vrot.slane %v1896, %v2089
    %v2091 = vlaneseq
    %v2092 = vshrl.u32 %v2091, 7
    %v2093 = vsub.s32 %v89, %v2092
    %v2094 = vrot.slane %v1899, %v2093
    %v2095 = vlaneseq
    %v2096 = vshrl.u32 %v2095, 7
    %v2097 = vsub.s32 %v89, %v2096
    %v2098 = vrot.slane %v1902, %v2097
    %v2099 = vlaneseq
    %v2100 = vshrl.u32 %v2099, 7
    %v2101 = vsub.s32 %v89, %v2100
    %v2102 = vrot.slane %v1905, %v2101
    %v2103 = vlaneseq
    %v2104 = vshrl.u32 %v2103, 7
    %v2105 = vsub.s32 %v89, %v2104
    %v2106 = vrot.slane %v1908, %v2105
    %v2107 = vlaneseq
    %v2108 = vshrl.u32 %v2107, 7
    %v2109 = vsub.s32 %v89, %v2108
    %v2110 = vrot.slane %v1911, %v2109
    %v2111 = vlaneseq
    %v2112 = vshrl.u32 %v2111, 7
    %v2113 = vsub.s32 %v89, %v2112
    %v2114 = vrot.slane %v1914, %v2113
    %v2115 = vlaneseq
    %v2116 = vshrl.u32 %v2115, 7
    %v2117 = vsub.s32 %v89, %v2116
    %v2118 = vrot.slane %v1917, %v2117
    %v2119 = vlaneseq
    %v2120 = vshrl.u32 %v2119, 7
    %v2121 = vsub.s32 %v89, %v2120
    %v2122 = vrot.slane %v1920, %v2121
    %v2123 = vlaneseq
    %v2124 = vshrl.u32 %v2123, 7
    %v2125 = vsub.s32 %v89, %v2124
    %v2126 = vrot.slane %v1923, %v2125
    %v2127 = vlaneseq
    %v2128 = vshrl.u32 %v2127, 7
    %v2129 = vsub.s32 %v89, %v2128
    %v2130 = vrot.slane %v1926, %v2129
    %v2131 = vlaneseq
    %v2132 = vshrl.u32 %v2131, 7
    %v2133 = vsub.s32 %v89, %v2132
    %v2134 = vrot.slane %v1929, %v2133
    %v2135 = vlaneseq
    %v2136 = vshrl.u32 %v2135, 7
    %v2137 = vsub.s32 %v89, %v2136
    %v2138 = vrot.slane %v1932, %v2137
    %v2139 = vlaneseq
    %v2140 = vshrl.u32 %v2139, 7
    %v2141 = vsub.s32 %v89, %v2140
    %v2142 = vrot.slane %v1935, %v2141
    %v2143 = vlaneseq
    %v2144 = vshrl.u32 %v2143, 7
    %v2145 = vsub.s32 %v89, %v2144
    %v2146 = vrot.slane %v1938, %v2145
    %v2147 = vlaneseq
    %v2148 = vshrl.u32 %v2147, 7
    %v2149 = vsub.s32 %v89, %v2148
    %v2150 = vrot.slane %v1941, %v2149
    %v2151 = vlaneseq
    %v2152 = vshrl.u32 %v2151, 7
    %v2153 = vsub.s32 %v89, %v2152
    %v2154 = vrot.slane %v1944, %v2153
    %v2155 = vlaneseq
    %v2156 = vshrl.u32 %v2155, 7
    %v2157 = vsub.s32 %v89, %v2156
    %v2158 = vrot.slane %v1947, %v2157
    %v2159 = vlaneseq
    %v2160 = vshrl.u32 %v2159, 7
    %v2161 = vsub.s32 %v89, %v2160
    %v2162 = vrot.slane %v1950, %v2161
    %v2163 = vlaneseq
    %v2164 = vshrl.u32 %v2163, 7
    %v2165 = vsub.s32 %v89, %v2164
    %v2166 = vrot.slane %v1953, %v2165
    %v2167 = vlaneseq
    %v2168 = vshrl.u32 %v2167, 7
    %v2169 = vsub.s32 %v89, %v2168
    %v2170 = vrot.slane %v1956, %v2169
    %v2171 = vlaneseq
    %v2172 = vshrl.u32 %v2171, 7
    %v2173 = vsub.s32 %v89, %v2172
    %v2174 = vrot.slane %v1959, %v2173
    %v2175 = vlaneseq
    %v2176 = vshrl.u32 %v2175, 7
    %v2177 = vsub.s32 %v89, %v2176
    %v2178 = vrot.slane %v1962, %v2177
    %v2179 = vlaneseq
    %v2180 = vshrl.u32 %v2179, 7
    %v2181 = vsub.s32 %v89, %v2180
    %v2182 = vrot.slane %v1965, %v2181
    %v2183 = vlaneseq
    %v2184 = vshrl.u32 %v2183, 7
    %v2185 = vsub.s32 %v89, %v2184
    %v2186 = vrot.slane %v1968, %v2185
    %v2187 = vlaneseq
    %v2188 = vshrl.u32 %v2187, 7
    %v2189 = vsub.s32 %v89, %v2188
    %v2190 = vrot.slane %v1971, %v2189
    %v2191 = vlaneseq
    %v2192 = vshrl.u32 %v2191, 7
    %v2193 = vsub.s32 %v89, %v2192
    %v2194 = vrot.slane %v1974, %v2193
    %v2195 = vlaneseq
    %v2196 = vshrl.u32 %v2195, 7
    %v2197 = vsub.s32 %v89, %v2196
    %v2198 = vrot.slane %v1977, %v2197
    %v2199 = vlaneseq
    %v2200 = vshrl.u32 %v2199, 7
    %v2201 = vsub.s32 %v89, %v2200
    %v2202 = vrot.slane %v1980, %v2201
    %v2203 = vlaneseq
    %v2204 = vshrl.u32 %v2203, 7
    %v2205 = vsub.s32 %v89, %v2204
    %v2206 = vrot.slane %v1983, %v2205
    %v2207 = vlaneseq
    %v2208 = vshrl.u32 %v2207, 7
    %v2209 = vsub.s32 %v89, %v2208
    %v2210 = vrot.slane %v1986, %v2209
    %v2211 = vlaneseq
    %v2212 = vshrl.u32 %v2211, 7
    %v2213 = vsub.s32 %v89, %v2212
    %v2214 = vrot.slane %v1989, %v2213
    %v2215 = vlaneseq
    %v2216 = vshrl.u32 %v2215, 7
    %v2217 = vsub.s32 %v89, %v2216
    %v2218 = vrot.slane %v1992, %v2217
    %v2219 = vlaneseq
    %v2220 = vshrl.u32 %v2219, 7
    %v2221 = vsub.s32 %v89, %v2220
    %v2222 = vrot.slane %v1995, %v2221
    %v2223 = vlaneseq
    %v2224 = vshrl.u32 %v2223, 7
    %v2225 = vsub.s32 %v89, %v2224
    %v2226 = vrot.slane %v1998, %v2225
    %v2227 = vlaneseq
    %v2228 = vshrl.u32 %v2227, 7
    %v2229 = vsub.s32 %v89, %v2228
    %v2230 = vrot.slane %v2001, %v2229
    %v2231 = vlaneseq
    %v2232 = vshrl.u32 %v2231, 7
    %v2233 = vsub.s32 %v89, %v2232
    %v2234 = vrot.slane %v2004, %v2233
    %v2235 = vlaneseq
    %v2236 = vshrl.u32 %v2235, 7
    %v2237 = vsub.s32 %v89, %v2236
    %v2238 = vrot.slane %v2007, %v2237
    %v2239 = vlaneseq
    %v2240 = vshrl.u32 %v2239, 7
    %v2241 = vsub.s32 %v89, %v2240
    %v2242 = vrot.slane %v2010, %v2241
    %v2243 = vlaneseq
    %v2244 = vshrl.u32 %v2243, 7
    %v2245 = vsub.s32 %v89, %v2244
    %v2246 = vrot.slane %v2013, %v2245
    %v2247 = vlaneseq
    %v2248 = vshrl.u32 %v2247, 7
    %v2249 = vsub.s32 %v89, %v2248
    %v2250 = vrot.slane %v2016, %v2249
    %v2251 = vlaneseq
    %v2252 = vshrl.u32 %v2251, 7
    %v2253 = vsub.s32 %v89, %v2252
    %v2254 = vrot.slane %v2019, %v2253
    %v2255 = vlaneseq
    %v2256 = vshrl.u32 %v2255, 7
    %v2257 = vsub.s32 %v89, %v2256
    %v2258 = vrot.slane %v2022, %v2257
    %v2259 = vlaneseq
    %v2260 = vshrl.u32 %v2259, 7
    %v2261 = vsub.s32 %v89, %v2260
    %v2262 = vrot.slane %v2025, %v2261
    %v2263 = vlaneseq
    %v2264 = vshrl.u32 %v2263, 7
    %v2265 = vsub.s32 %v89, %v2264
    %v2266 = vrot.slane %v2028, %v2265
    %v2267 = vlaneseq
    %v2268 = vshrl.u32 %v2267, 7
    %v2269 = vsub.s32 %v89, %v2268
    %v2270 = vrot.slane %v2031, %v2269
    %v2271 = vlaneseq
    %v2272 = vshrl.u32 %v2271, 7
    %v2273 = vsub.s32 %v89, %v2272
    %v2274 = vrot.slane %v2034, %v2273
    %v2275 = vlaneseq
    %v2276 = vshrl.u32 %v2275, 7
    %v2277 = vsub.s32 %v89, %v2276
    %v2278 = vrot.slane %v2037, %v2277
    %v2279 = vlaneseq
    %v2280 = vshrl.u32 %v2279, 7
    %v2281 = vsub.s32 %v89, %v2280
    %v2282 = vrot.slane %v2040, %v2281
    %v2283 = vlaneseq
    %v2284 = vshrl.u32 %v2283, 7
    %v2285 = vsub.s32 %v89, %v2284
    %v2286 = vrot.slane %v2043, %v2285
    %v2287 = vlaneseq
    %v2288 = vshrl.u32 %v2287, 7
    %v2289 = vsub.s32 %v89, %v2288
    %v2290 = vrot.slane %v2046, %v2289
    %v2291 = vlaneseq
    %v2292 = vshrl.u32 %v2291, 7
    %v2293 = vsub.s32 %v89, %v2292
    %v2294 = vrot.slane %v2049, %v2293
    %v2295 = vlaneseq
    %v2296 = vshrl.u32 %v2295, 7
    %v2297 = vsub.s32 %v89, %v2296
    %v2298 = vrot.slane %v2052, %v2297
    %v2299 = vlaneseq
    %v2300 = vshrl.u32 %v2299, 7
    %v2301 = vsub.s32 %v89, %v2300
    %v2302 = vrot.slane %v2055, %v2301
    %v2303 = vlaneseq
    %v2304 = vshrl.u32 %v2303, 7
    %v2305 = vsub.s32 %v89, %v2304
    %v2306 = vrot.slane %v2058, %v2305
    %v2307 = vlaneseq
    %v2308 = vshrl.u32 %v2307, 7
    %v2309 = vsub.s32 %v89, %v2308
    %v2310 = vrot.slane %v2061, %v2309
    %v2311 = vlaneseq
    %v2312 = vshrl.u32 %v2311, 7
    %v2313 = vsub.s32 %v89, %v2312
    %v2314 = vrot.slane %v2064, %v2313
    %v2315 = vlaneseq
    %v2316 = vshrl.u32 %v2315, 7
    %v2317 = vsub.s32 %v89, %v2316
    %v2318 = vrot.slane %v2067, %v2317
    %v2319 = vlaneseq
    %v2320 = vshrl.u32 %v2319, 7
    %v2321 = vsub.s32 %v89, %v2320
    %v2322 = vrot.slane %v2070, %v2321
    %v2323 = vlaneseq
    %v2324 = vshrl.u32 %v2323, 7
    %v2325 = vsub.s32 %v89, %v2324
    %v2326 = vrot.slane %v2073, %v2325
    %v2327 = vlaneseq
    %v2328 = vshrl.u32 %v2327, 7
    %v2329 = vsub.s32 %v89, %v2328
    %v2330 = vrot.slane %v2076, %v2329
    %v2331 = vlaneseq
    %v2332 = vshrl.u32 %v2331, 7
    %v2333 = vsub.s32 %v89, %v2332
    %v2334 = vrot.slane %v2079, %v2333
    %v2335 = vlaneseq
    %v2336 = vshrl.u32 %v2335, 7
    %v2337 = vsub.s32 %v89, %v2336
    %v2338 = vrot.slane %v2082, %v2337
    %vm2339 = vcmask 1041409
    %v2340 = vsel %vm2339, %v2090, %v2086
    %vm2341 = vcmask 1042434
    %v2342 = vsel %vm2341, %v2094, %v2340
    %vm2343 = vcmask 1043459
    %v2344 = vsel %vm2343, %v2098, %v2342
    %vm2345 = vcmask 1044484
    %v2346 = vsel %vm2345, %v2102, %v2344
    %vm2347 = vcmask 1045509
    %v2348 = vsel %vm2347, %v2106, %v2346
    %vm2349 = vcmask 1046534
    %v2350 = vsel %vm2349, %v2110, %v2348
    %vm2351 = vcmask 1047559
    %v2352 = vsel %vm2351, %v2114, %v2350
    %v2353 = vsel %vm2339, %v2122, %v2118
    %v2354 = vsel %vm2341, %v2126, %v2353
    %v2355 = vsel %vm2343, %v2130, %v2354
    %v2356 = vsel %vm2345, %v2134, %v2355
    %v2357 = vsel %vm2347, %v2138, %v2356
    %v2358 = vsel %vm2349, %v2142, %v2357
    %v2359 = vsel %vm2351, %v2146, %v2358
    %v2360 = vsel %vm2339, %v2154, %v2150
    %v2361 = vsel %vm2341, %v2158, %v2360
    %v2362 = vsel %vm2343, %v2162, %v2361
    %v2363 = vsel %vm2345, %v2166, %v2362
    %v2364 = vsel %vm2347, %v2170, %v2363
    %v2365 = vsel %vm2349, %v2174, %v2364
    %v2366 = vsel %vm2351, %v2178, %v2365
    %v2367 = vsel %vm2339, %v2186, %v2182
    %v2368 = vsel %vm2341, %v2190, %v2367
    %v2369 = vsel %vm2343, %v2194, %v2368
    %v2370 = vsel %vm2345, %v2198, %v2369
    %v2371 = vsel %vm2347, %v2202, %v2370
    %v2372 = vsel %vm2349, %v2206, %v2371
    %v2373 = vsel %vm2351, %v2210, %v2372
    %v2374 = vsel %vm2339, %v2218, %v2214
    %v2375 = vsel %vm2341, %v2222, %v2374
    %v2376 = vsel %vm2343, %v2226, %v2375
    %v2377 = vsel %vm2345, %v2230, %v2376
    %v2378 = vsel %vm2347, %v2234, %v2377
    %v2379 = vsel %vm2349, %v2238, %v2378
    %v2380 = vsel %vm2351, %v2242, %v2379
    %v2381 = vsel %vm2339, %v2250, %v2246
    %v2382 = vsel %vm2341, %v2254, %v2381
    %v2383 = vsel %vm2343, %v2258, %v2382
    %v2384 = vsel %vm2345, %v2262, %v2383
    %v2385 = vsel %vm2347, %v2266, %v2384
    %v2386 = vsel %vm2349, %v2270, %v2385
    %v2387 = vsel %vm2351, %v2274, %v2386
    %v2388 = vsel %vm2339, %v2282, %v2278
    %v2389 = vsel %vm2341, %v2286, %v2388
    %v2390 = vsel %vm2343, %v2290, %v2389
    %v2391 = vsel %vm2345, %v2294, %v2390
    %v2392 = vsel %vm2347, %v2298, %v2391
    %v2393 = vsel %vm2349, %v2302, %v2392
    %v2394 = vsel %vm2351, %v2306, %v2393
    %v2395 = vsel %vm2339, %v2314, %v2310
    %v2396 = vsel %vm2341, %v2318, %v2395
    %v2397 = vsel %vm2343, %v2322, %v2396
    %v2398 = vsel %vm2345, %v2326, %v2397
    %v2399 = vsel %vm2347, %v2330, %v2398
    %v2400 = vsel %vm2349, %v2334, %v2399
    %v2401 = vsel %vm2351, %v2338, %v2400
    %v2410 = vsel %vm1121, %v2352, 0.0
    %2411 = vadd.xlane.f32.xlu0 %v2410
    %v2412 = vpop.xlane.xlu0 %2411
    %v2413 = vsel %vm1121, %v2359, 0.0
    %2414 = vadd.xlane.f32.xlu0 %v2413
    %v2415 = vpop.xlane.xlu0 %2414
    %v2416 = vsel %vm1121, %v2366, 0.0
    %2417 = vadd.xlane.f32.xlu0 %v2416
    %v2418 = vpop.xlane.xlu0 %2417
    %v2419 = vsel %vm1121, %v2373, 0.0
    %2420 = vadd.xlane.f32.xlu0 %v2419
    %v2421 = vpop.xlane.xlu0 %2420
    %v2422 = vsel %vm1121, %v2380, 0.0
    %2423 = vadd.xlane.f32.xlu0 %v2422
    %v2424 = vpop.xlane.xlu0 %2423
    %v2425 = vsel %vm1121, %v2387, 0.0
    %2426 = vadd.xlane.f32.xlu0 %v2425
    %v2427 = vpop.xlane.xlu0 %2426
    %v2428 = vsel %vm1121, %v2394, 0.0
    %2429 = vadd.xlane.f32.xlu0 %v2428
    %v2430 = vpop.xlane.xlu0 %2429
    %v2431 = vsel %vm1121, %v2401, 0.0
    %2432 = vadd.xlane.f32.xlu0 %v2431
    %v2433 = vpop.xlane.xlu0 %2432
    %v2434 = vadd.f32 %v2412, 1e-12
    %v2435 = vadd.f32 %v2415, 1e-12
    %v2436 = vadd.f32 %v2418, 1e-12
    %v2437 = vadd.f32 %v2421, 1e-12
    %v2438 = vadd.f32 %v2424, 1e-12
    %v2439 = vadd.f32 %v2427, 1e-12
    %v2440 = vadd.f32 %v2430, 1e-12
    %v2441 = vadd.f32 %v2433, 1e-12
    %v2442 = vlog2.pop %v2434
    %v2443 = vmul.f32 %v2442, 0.6931472
    %v2444 = vlog2.pop %v2435
    %v2445 = vmul.f32 %v2444, 0.6931472
    %v2446 = vlog2.pop %v2436
    %v2447 = vmul.f32 %v2446, 0.6931472
    %v2448 = vlog2.pop %v2437
    %v2449 = vmul.f32 %v2448, 0.6931472
    %v2450 = vlog2.pop %v2438
    %v2451 = vmul.f32 %v2450, 0.6931472
    %v2452 = vlog2.pop %v2439
    %v2453 = vmul.f32 %v2452, 0.6931472
    %v2454 = vlog2.pop %v2440
    %v2455 = vmul.f32 %v2454, 0.6931472
    %v2456 = vlog2.pop %v2441
    %v2457 = vmul.f32 %v2456, 0.6931472
    %v2459 = vlaneseq
    %v2460 = vshrl.u32 %v2459, 7
    %v2461 = vsub.s32 0, %v2460
    %v2462 = vrot.slane %v1125, %v2461
    %2464 = vbcast.lane.b32.xlu0 %v2462, 256
    %v2465 = vpop.permute.xlu0 %2464
    %v2466 = vlaneseq
    %v2467 = vshrl.u32 %v2466, 7
    %v2468 = vsub.s32 1, %v2467
    %v2469 = vrot.slane %v1125, %v2468
    %2471 = vbcast.lane.b32.xlu0 %v2469, 256
    %v2472 = vpop.permute.xlu0 %2471
    %v2473 = vlaneseq
    %v2474 = vshrl.u32 %v2473, 7
    %v2475 = vsub.s32 2, %v2474
    %v2476 = vrot.slane %v1125, %v2475
    %2478 = vbcast.lane.b32.xlu0 %v2476, 256
    %v2479 = vpop.permute.xlu0 %2478
    %v2480 = vlaneseq
    %v2481 = vshrl.u32 %v2480, 7
    %v2482 = vsub.s32 3, %v2481
    %v2483 = vrot.slane %v1125, %v2482
    %2485 = vbcast.lane.b32.xlu0 %v2483, 256
    %v2486 = vpop.permute.xlu0 %2485
    %v2487 = vlaneseq
    %v2488 = vshrl.u32 %v2487, 7
    %v2489 = vsub.s32 4, %v2488
    %v2490 = vrot.slane %v1125, %v2489
    %2492 = vbcast.lane.b32.xlu0 %v2490, 256
    %v2493 = vpop.permute.xlu0 %2492
    %v2494 = vlaneseq
    %v2495 = vshrl.u32 %v2494, 7
    %v2496 = vsub.s32 5, %v2495
    %v2497 = vrot.slane %v1125, %v2496
    %2499 = vbcast.lane.b32.xlu0 %v2497, 256
    %v2500 = vpop.permute.xlu0 %2499
    %v2501 = vlaneseq
    %v2502 = vshrl.u32 %v2501, 7
    %v2503 = vsub.s32 6, %v2502
    %v2504 = vrot.slane %v1125, %v2503
    %2506 = vbcast.lane.b32.xlu0 %v2504, 256
    %v2507 = vpop.permute.xlu0 %2506
    %v2508 = vlaneseq
    %v2509 = vshrl.u32 %v2508, 7
    %v2510 = vsub.s32 7, %v2509
    %v2511 = vrot.slane %v1125, %v2510
    %2513 = vbcast.lane.b32.xlu0 %v2511, 256
    %v2514 = vpop.permute.xlu0 %2513
    %v2523 = vsub.f32 %v2443, %v2465
    %v2524 = vsub.f32 %v2445, %v2472
    %v2525 = vsub.f32 %v2447, %v2479
    %v2526 = vsub.f32 %v2449, %v2486
    %v2527 = vsub.f32 %v2451, %v2493
    %v2528 = vsub.f32 %v2453, %v2500
    %v2529 = vsub.f32 %v2455, %v2507
    %v2530 = vsub.f32 %v2457, %v2514
    %2539 = vset.pattern.permute.xlu0 0
    %2540 = vperm.xlu0 %2539, %v2523
    %v2541 = vpop.permute.xlu0 %2540
    %2542 = vset.pattern.permute.xlu0 0
    %2543 = vperm.xlu0 %2542, %v2524
    %v2544 = vpop.permute.xlu0 %2543
    %2545 = vset.pattern.permute.xlu0 0
    %2546 = vperm.xlu0 %2545, %v2525
    %v2547 = vpop.permute.xlu0 %2546
    %2548 = vset.pattern.permute.xlu0 0
    %2549 = vperm.xlu0 %2548, %v2526
    %v2550 = vpop.permute.xlu0 %2549
    %2551 = vset.pattern.permute.xlu0 0
    %2552 = vperm.xlu0 %2551, %v2527
    %v2553 = vpop.permute.xlu0 %2552
    %2554 = vset.pattern.permute.xlu0 0
    %2555 = vperm.xlu0 %2554, %v2528
    %v2556 = vpop.permute.xlu0 %2555
    %2557 = vset.pattern.permute.xlu0 0
    %2558 = vperm.xlu0 %2557, %v2529
    %v2559 = vpop.permute.xlu0 %2558
    %2560 = vset.pattern.permute.xlu0 0
    %2561 = vperm.xlu0 %2560, %v2530
    %v2562 = vpop.permute.xlu0 %2561
    %v2563 = vlaneseq
    %v2564 = vshrl.u32 %v2563, 7
    %v2565 = vsub.s32 %v89, %v2564
    %v2566 = vrot.slane %v2541, %v2565
    %v2567 = vlaneseq
    %v2568 = vshrl.u32 %v2567, 7
    %v2569 = vsub.s32 %v89, %v2568
    %v2570 = vrot.slane %v2544, %v2569
    %v2571 = vlaneseq
    %v2572 = vshrl.u32 %v2571, 7
    %v2573 = vsub.s32 %v89, %v2572
    %v2574 = vrot.slane %v2547, %v2573
    %v2575 = vlaneseq
    %v2576 = vshrl.u32 %v2575, 7
    %v2577 = vsub.s32 %v89, %v2576
    %v2578 = vrot.slane %v2550, %v2577
    %v2579 = vlaneseq
    %v2580 = vshrl.u32 %v2579, 7
    %v2581 = vsub.s32 %v89, %v2580
    %v2582 = vrot.slane %v2553, %v2581
    %v2583 = vlaneseq
    %v2584 = vshrl.u32 %v2583, 7
    %v2585 = vsub.s32 %v89, %v2584
    %v2586 = vrot.slane %v2556, %v2585
    %v2587 = vlaneseq
    %v2588 = vshrl.u32 %v2587, 7
    %v2589 = vsub.s32 %v89, %v2588
    %v2590 = vrot.slane %v2559, %v2589
    %v2591 = vlaneseq
    %v2592 = vshrl.u32 %v2591, 7
    %v2593 = vsub.s32 %v89, %v2592
    %v2594 = vrot.slane %v2562, %v2593
    %v2595 = vsel %vm2339, %v2570, %v2566
    %v2596 = vsel %vm2341, %v2574, %v2595
    %v2597 = vsel %vm2343, %v2578, %v2596
    %v2598 = vsel %vm2345, %v2582, %v2597
    %v2599 = vsel %vm2347, %v2586, %v2598
    %v2600 = vsel %vm2349, %v2590, %v2599
    %v2601 = vsel %vm2351, %v2594, %v2600
    %v2603 = vsel %vm1119, %v2601, 0.0
    %v2604 = vsel %vm1121, %v2603, 0.0
    %2605 = vadd.xlane.f32.xlu0 %v2604
    %v2606 = vpop.xlane.xlu0 %2605
    %v2607 = vmul.f32 %v2606, 0.14285715
    %v2608 = vrot.slane %v2607, 4
    %v2609 = vadd.f32 %v2607, %v2608
    %v2610 = vrot.slane %v2609, 2
    %v2611 = vadd.f32 %v2609, %v2610
    %v2612 = vrot.slane %v2611, 1
    %v2613 = vadd.f32 %v2611, %v2612
    %v2614 = vmul.f32 %v2613, 0.125
    %2615 = vst.msk [vmem:[#allocation11] sm:$0x1] %vm86, %v2614
    // Predicated region
    $region34: #{cell_loss.1} parent=1 // pred_check
      _
    $region35: #{cell_loss.1} parent=1 // pred_check_branch
      %2617 = sbr.rel (0) target = $region37
    $region36: #{cell_loss.1} parent=1 // pred_region
      %s2619 = ssub.s32 16, 16
      %2620 = vsyncadd [#allocation4], %s2619
      %s2622 = sshll.u32 [#allocation8], 4
      %s2623 = int_to_ptr.vmem [resolvable:$true] %s2622
      %2625 = dma.vmem_to_hbm [thread:$0]  %s2623, 16, %s5, [#allocation4]
    $region37: #{cell_loss.1} parent=1 // pred_fallthru
      _
    // Predicated region
    $region38: #{cell_loss.1} parent=1 // pred_check
      _
    $region39: #{cell_loss.1} parent=1 // pred_check_branch
      %2627 = sbr.rel (0) target = $region41
    $region40: #{cell_loss.1} parent=1 // pred_region
      %s2629 = ssub.s32 16, 16
      %2630 = vsyncadd [#allocation10], %s2629
      %s2632 = sshll.u32 [#allocation9], 4
      %s2633 = int_to_ptr.vmem [resolvable:$true] %s2632
      %2635 = dma.vmem_to_hbm [thread:$0]  %s2633, 16, %s6, [#allocation10]
    $region41: #{cell_loss.1} parent=1 // pred_fallthru
      _
    // Predicated region
    $region42: #{cell_loss.1} parent=1 // pred_check
      _
    $region43: #{cell_loss.1} parent=1 // pred_check_branch
      %2637 = sbr.rel (0) target = $region45
    $region44: #{cell_loss.1} parent=1 // pred_region
      %s2639 = ssub.s32 16, 16
      %2640 = vsyncadd [#allocation10], %s2639
      %s2642 = sshll.u32 [#allocation11], 4
      %s2643 = int_to_ptr.vmem [resolvable:$true] %s2642
      %2645 = dma.vmem_to_hbm [thread:$0]  %s2643, 16, %s7, [#allocation10]
    $region45: #{cell_loss.1} parent=1 // pred_fallthru
      _
    // Predicated region
    $region46: #{cell_loss.1} parent=1 // pred_check
      _
    $region47: #{cell_loss.1} parent=1 // pred_check_branch
      %2647 = sbr.rel (0) target = $region49
    $region48: #{cell_loss.1} parent=1 // pred_region
      %2648 = dma.done [#allocation4], 16
    $region49: #{cell_loss.1} parent=1 // pred_fallthru
      _
    // Predicated region
    $region50: #{cell_loss.1} parent=1 // pred_check
      _
    $region51: #{cell_loss.1} parent=1 // pred_check_branch
      %2650 = sbr.rel (0) target = $region53
    $region52: #{cell_loss.1} parent=1 // pred_region
      %2651 = dma.done [#allocation10], 16
    $region53: #{cell_loss.1} parent=1 // pred_fallthru
      _
    // Predicated region
    $region54: #{cell_loss.1} parent=1 // pred_check
      _
    $region55: #{cell_loss.1} parent=1 // pred_check_branch
      %2653 = sbr.rel (0) target = $region57
    $region56: #{cell_loss.1} parent=1 // pred_region
      %2654 = dma.done [#allocation10], 16
    $region57: #{cell_loss.1} parent=1 // pred_fallthru
      _
    %2655 = vsyncpa [#allocation3], 1
    %2656 = vsyncpa [#allocation6], 1
    %2657 = vsyncpa [#allocation4], 1
    %2658 = vsyncpa [#allocation10], 1

</llo_original>
